<compile_context>
chip_gen: v6e
topology: v6e:2x2x1
jax: 0.10.0
libtpu: 0.0.40
codegen_flags: <defaults>
</compile_context>

<pallas_src>
import jax
import jax.numpy as jnp
from jax.experimental import pallas as pl
from jax.experimental.pallas import tpu as pltpu

# ---------------- small, module-consistent config -------------------------
B = 2                      # batch
S = 8                      # max_seq_len
H = 32                     # hidden size
NUM_HEADS = 4
HEAD_DIM = H // NUM_HEADS  # 8
INTER = 4 * H              # 128 (lane-dense FFN intermediate)
VOCAB = 64
EPS = 1e-5                 # roberta layer_norm_eps
LANE = 128

T = B * S                  # 16 folded rows for dense / LayerNorm work
G = B * NUM_HEADS          # 8  leading batch dim for head-major attention
assert 4 * H == LANE and INTER == LANE and 3 * H == 96


# ---------------- Pallas kernel: one fused encoder layer -------------------
def encoder_layer_kernel(
    x_ref,      # [T, H]         f32   folded hidden states
    mask_ref,   # [B, S]         f32   attention mask (1 = token, 0 = pad)
    w_big_ref,  # [2, H, 128]    bf16  [0,:,0:96]=wq|wk|wv, [0,:,96:128]=wo, [1]=w1
    w2_ref,     # [INTER, H]     bf16  FFN down-projection
    p_ref,      # [4, 128]       f32   packed small params (biases + LN)
    o_ref,      # [T, H]         f32
):
  x = x_ref[...]                                    # [T, H] f32
  p = p_ref[...]                                    # [4, 128] f32
  w_big = w_big_ref[...]                            # [2, H, 128] bf16

  b_qkv = p[0:1, 0:3 * H]                           # [1, 96]
  bi1 = p[1:2, :]                                   # [1, 128]
  bo = p[2:3, 0:H]
  g1 = p[2:3, H:2 * H]
  be1 = p[2:3, 2 * H:3 * H]
  bi2 = p[2:3, 3 * H:4 * H]
  g2 = p[3:4, 0:H]
  be2 = p[3:4, H:2 * H]

  def layer_norm(v, g, b):                          # all-f32 VPU math
    mu = jnp.mean(v, axis=-1, keepdims=True)
    var = jnp.mean(jnp.square(v - mu), axis=-1, keepdims=True)
    return (v - mu) * jax.lax.rsqrt(var + EPS) * g + b

  # ---- fused QKV projection: one [16,32]x[32,96] MXU op (scale folded) ----
  qkv = jnp.dot(x.astype(jnp.bfloat16), w_big[0, :, 0:3 * H],
                preferred_element_type=jnp.float32) + b_qkv      # [T, 3H] f32

  def to_heads(t):  # [T, H] -> [G, S, HD], g = head * B + batch
    return jnp.stack(
        [t[:, h * HEAD_DIM:(h + 1) * HEAD_DIM].reshape(B, S, HEAD_DIM)
         for h in range(NUM_HEADS)], axis=0).reshape(G, S, HEAD_DIM)

  q_g = to_heads(qkv[:, 0:H]).astype(jnp.bfloat16)
  k_g = to_heads(qkv[:, H:2 * H]).astype(jnp.bfloat16)
  v_g = to_heads(qkv[:, 2 * H:3 * H]).astype(jnp.bfloat16)

  # scores for all (head, batch) pairs in one batched contraction
  s = jnp.einsum('gsd,gtd->gst', q_g, k_g,
                 preferred_element_type=jnp.float32)             # [G, S, S]

  # additive attention mask: padded key positions -> -1e9
  mask_bias = (mask_ref[...] - 1.0) * 1e9                        # [B, S]
  s = s + jnp.broadcast_to(mask_bias[None, :, None, :],
                           (NUM_HEADS, B, 1, S)).reshape(G, 1, S)

  s = s - jnp.max(s, axis=-1, keepdims=True)
  prob = jnp.exp(s)
  prob = prob * pl.reciprocal(jnp.sum(prob, axis=-1, keepdims=True),
                              approx=True)

  ctx = jnp.einsum('gst,gtd->gsd', prob.astype(jnp.bfloat16), v_g,
                   preferred_element_type=jnp.float32)           # [G, S, HD]

  # ---- concat heads along lanes -> [T, H]; single output-proj matmul ------
  ctx4 = ctx.reshape(NUM_HEADS, B, S, HEAD_DIM)
  ctx_cat = jnp.concatenate([ctx4[h] for h in range(NUM_HEADS)],
                            axis=-1).reshape(T, H)
  attn = jnp.dot(ctx_cat.astype(jnp.bfloat16), w_big[0, :, 3 * H:4 * H],
                 preferred_element_type=jnp.float32) + bo        # [T, H]

  h1 = layer_norm(x + attn, g1, be1)                             # residual + LN

  # ---- feed-forward (intermediate [T, 128] is fully lane-dense) -----------
  ff = jnp.dot(h1.astype(jnp.bfloat16), w_big[1],
               preferred_element_type=jnp.float32) + bi1         # [T, INTER]
  # TODO(synk): HF BERT/RoBERTa default is exact erf GELU; tanh approximation
  # is used here (and in the reference) — differences are at tolerance level.
  ff = 0.5 * ff * (1.0 + jnp.tanh(0.7978845608028654
                                  * (ff + 0.044715 * ff * ff * ff)))
  ff = jnp.dot(ff.astype(jnp.bfloat16), w2_ref[...],
               preferred_element_type=jnp.float32) + bi2         # [T, H]

  o_ref[...] = layer_norm(h1 + ff, g2, be2)                      # [T, H] f32


# ---------------- one-time weight packing (hoisted out of per-call path) ---
def pack_weights(p):
  """Pack f32 params into the kernel's fused bf16/f32 layouts (run ONCE)."""
  scale = jnp.float32(1.0 / (HEAD_DIM ** 0.5))
  wqkv = jnp.concatenate([p["wq"] * scale, p["wk"], p["wv"]], axis=1)  # [H,3H]
  slab0 = jnp.concatenate([wqkv, p["wo"]], axis=1)                     # [H,128]
  w_big = jnp.stack([slab0, p["w1"]], axis=0).astype(jnp.bfloat16)     # [2,H,128]
  w2 = p["w2"].astype(jnp.bfloat16)                                    # [128,H]

  row0 = jnp.concatenate([p["bq"] * scale, p["bk"], p["bv"],
                          jnp.zeros((1, LANE - 3 * H), jnp.float32)], axis=1)
  row1 = p["bi1"]                                                      # [1,128]
  row2 = jnp.concatenate([p["bo"], p["g1"], p["be1"], p["bi2"]], axis=1)
  row3 = jnp.concatenate([p["g2"], p["be2"],
                          jnp.zeros((1, LANE - 2 * H), jnp.float32)], axis=1)
  p_small = jnp.concatenate([row0, row1, row2, row3], axis=0)          # [4,128]
  return w_big, w2, p_small


# ---------------- per-call wrapper ------------------------------------------
@jax.jit
def bert_encoder_layer(x, mask, packed):
  """x: [B,S,H] f32; mask: [B,S] f32; packed: pack_weights() output."""
  w_big, w2, p_small = packed
  vmem = pl.BlockSpec(memory_space=pltpu.MemorySpace.VMEM)
  out = pl.pallas_call(
      encoder_layer_kernel,
      out_shape=jax.ShapeDtypeStruct((T, H), jnp.float32),
      in_specs=[vmem] * 5,
      out_specs=vmem,
  )(x.reshape(T, H), mask, w_big, w2, p_small)
  return out.reshape(B, S, H)


# ---------------- plain-JAX reference (for sanity checking) ----------------
def reference_layer(x, mask, p):
  def dense(v, w, b):
    return v @ w + b

  def ln(v, g, b):
    mu = v.mean(-1, keepdims=True)
    var = ((v - mu) ** 2).mean(-1, keepdims=True)
    return (v - mu) / jnp.sqrt(var + EPS) * g + b

  q, k, v = (dense(x, p["wq"], p["bq"]), dense(x, p["wk"], p["bk"]),
             dense(x, p["wv"], p["bv"]))

  def split(t):
    return t.reshape(B, S, NUM_HEADS, HEAD_DIM).transpose(0, 2, 1, 3)

  qh, kh, vh = split(q), split(k), split(v)
  s = jnp.einsum('bnsd,bntd->bnst', qh, kh) / jnp.sqrt(float(HEAD_DIM))
  s = s + (mask - 1.0)[:, None, None, :] * 1e9
  pr = jax.nn.softmax(s, axis=-1)
  ctx = jnp.einsum('bnst,bntd->bnsd', pr, vh).transpose(0, 2, 1, 3).reshape(B, S, H)
  h1 = ln(x + dense(ctx, p["wo"], p["bo"]), p["g1"], p["be1"])
  ff = dense(h1, p["w1"], p["bi1"])
  ff = 0.5 * ff * (1.0 + jnp.tanh(0.7978845608028654 * (ff + 0.044715 * ff ** 3)))
  return ln(h1 + dense(ff, p["w2"], p["bi2"]), p["g2"], p["be2"])


# ---------------- deterministic parameter init + glue ----------------------
def make_params(key):
  ks = jax.random.split(key, 8)
  init = lambda k, shape: (0.02 * jax.random.normal(k, shape)).astype(jnp.float32)
  return {
      "tok_emb": init(ks[0], (VOCAB, H)),
      "pos_emb": init(ks[1], (S, H)),
      "wq": init(ks[2], (H, H)), "bq": jnp.zeros((1, H), jnp.float32),
      "wk": init(ks[3], (H, H)), "bk": jnp.zeros((1, H), jnp.float32),
      "wv": init(ks[4], (H, H)), "bv": jnp.zeros((1, H), jnp.float32),
      "wo": init(ks[5], (H, H)), "bo": jnp.zeros((1, H), jnp.float32),
      "g1": jnp.ones((1, H), jnp.float32), "be1": jnp.zeros((1, H), jnp.float32),
      "w1": init(ks[6], (H, INTER)), "bi1": jnp.zeros((1, INTER), jnp.float32),
      "w2": init(ks[7], (INTER, H)), "bi2": jnp.zeros((1, H), jnp.float32),
      "g2": jnp.ones((1, H), jnp.float32), "be2": jnp.zeros((1, H), jnp.float32),
  }


if __name__ == "__main__":
  key = jax.random.PRNGKey(0)
  pkey, idkey = jax.random.split(key)
  params = make_params(pkey)
  packed = pack_weights(params)          # one-time weight re-layout (not per call)

  # synthetic "tokenized" input ids + attention mask (tokenize() pads to
  # max_seq_len; mark the last two positions of example 1 as padding)
  ids = jax.random.randint(idkey, (B, S), 0, VOCAB, dtype=jnp.int32)
  mask = jnp.ones((B, S), jnp.float32).at[1, S - 2:].set(0.0)

  # embedding lookup + position embeddings (plain-JAX glue)
  x = params["tok_emb"][ids] + params["pos_emb"][None, :, :]   # [B, S, H]

  out = jax.block_until_ready(bert_encoder_layer(x, mask, packed))

  assert out.shape == (B, S, H) and out.dtype == jnp.float32
  assert bool(jnp.all(jnp.isfinite(out)))

  ref = reference_layer(x, mask, params)
  err = float(jnp.max(jnp.abs(out - ref)))
  assert err < 3e-2, f"max abs error vs reference too large: {err}"

  print("KERNEL_OK")
</pallas_src>

<mosaic_0001>
module attributes {stable_mosaic.version = 11 : i64} {
  func.func @encoder_layer_kernel(%arg0: memref<16x32xf32, #tpu.memory_space<vmem>>, %arg1: memref<2x8xf32, #tpu.memory_space<vmem>>, %arg2: memref<2x32x128xbf16, #tpu.memory_space<vmem>>, %arg3: memref<128x32xbf16, #tpu.memory_space<vmem>>, %arg4: memref<4x128xf32, #tpu.memory_space<vmem>>, %arg5: memref<16x32xf32, #tpu.memory_space<vmem>>) attributes {dimension_semantics = [], scalar_prefetch = 0 : i64, scratch_operands = 0 : i64, tpu.core_type = #tpu.core_type<tc>} {
    %c0 = arith.constant 0 : index
    %c0_0 = arith.constant 0 : index
    %0 = vector.load %arg0[%c0, %c0_0] : memref<16x32xf32, #tpu.memory_space<vmem>>, vector<16x32xf32>
    %c0_1 = arith.constant 0 : index
    %c0_2 = arith.constant 0 : index
    %1 = vector.load %arg4[%c0_1, %c0_2] : memref<4x128xf32, #tpu.memory_space<vmem>>, vector<4x128xf32>
    %c0_3 = arith.constant 0 : index
    %c0_4 = arith.constant 0 : index
    %c0_5 = arith.constant 0 : index
    %2 = vector.load %arg2[%c0_3, %c0_4, %c0_5] : memref<2x32x128xbf16, #tpu.memory_space<vmem>>, vector<2x32x128xbf16>
    %3 = vector.extract_strided_slice %1 {offsets = [0, 0], sizes = [1, 96], strides = [1, 1]} : vector<4x128xf32> to vector<1x96xf32>
    %4 = vector.extract_strided_slice %1 {offsets = [1, 0], sizes = [1, 128], strides = [1, 1]} : vector<4x128xf32> to vector<1x128xf32>
    %5 = vector.extract_strided_slice %1 {offsets = [2, 0], sizes = [1, 32], strides = [1, 1]} : vector<4x128xf32> to vector<1x32xf32>
    %6 = vector.extract_strided_slice %1 {offsets = [2, 32], sizes = [1, 32], strides = [1, 1]} : vector<4x128xf32> to vector<1x32xf32>
    %7 = vector.extract_strided_slice %1 {offsets = [2, 64], sizes = [1, 32], strides = [1, 1]} : vector<4x128xf32> to vector<1x32xf32>
    %8 = vector.extract_strided_slice %1 {offsets = [2, 96], sizes = [1, 32], strides = [1, 1]} : vector<4x128xf32> to vector<1x32xf32>
    %9 = vector.extract_strided_slice %1 {offsets = [3, 0], sizes = [1, 32], strides = [1, 1]} : vector<4x128xf32> to vector<1x32xf32>
    %10 = vector.extract_strided_slice %1 {offsets = [3, 32], sizes = [1, 32], strides = [1, 1]} : vector<4x128xf32> to vector<1x32xf32>
    %11 = arith.truncf %0 : vector<16x32xf32> to vector<16x32xbf16>
    %12 = vector.extract_strided_slice %2 {offsets = [0, 0, 0], sizes = [1, 32, 96], strides = [1, 1, 1]} : vector<2x32x128xbf16> to vector<1x32x96xbf16>
    %13 = vector.shape_cast %12 : vector<1x32x96xbf16> to vector<32x96xbf16>
    %cst = arith.constant dense<0.000000e+00> : vector<16x96xf32>
    %14 = tpu.matmul %11, %13, %cst {dimension_numbers = #tpu.dot_dimension_numbers<[1], [0], [0], [1], [0, 0, 1, 1], [], []>} : vector<16x32xbf16>, vector<32x96xbf16>, vector<16x96xf32> -> vector<16x96xf32>
    %15 = vector.broadcast %3 : vector<1x96xf32> to vector<16x96xf32>
    %16 = arith.addf %14, %15 : vector<16x96xf32>
    %17 = vector.extract_strided_slice %16 {offsets = [0, 0], sizes = [16, 32], strides = [1, 1]} : vector<16x96xf32> to vector<16x32xf32>
    %18 = vector.extract_strided_slice %17 {offsets = [0, 0], sizes = [16, 8], strides = [1, 1]} : vector<16x32xf32> to vector<16x8xf32>
    %19 = vector.shape_cast %18 : vector<16x8xf32> to vector<2x8x8xf32>
    %20 = vector.extract_strided_slice %17 {offsets = [0, 8], sizes = [16, 8], strides = [1, 1]} : vector<16x32xf32> to vector<16x8xf32>
    %21 = vector.shape_cast %20 : vector<16x8xf32> to vector<2x8x8xf32>
    %22 = vector.extract_strided_slice %17 {offsets = [0, 16], sizes = [16, 8], strides = [1, 1]} : vector<16x32xf32> to vector<16x8xf32>
    %23 = vector.shape_cast %22 : vector<16x8xf32> to vector<2x8x8xf32>
    %24 = vector.extract_strided_slice %17 {offsets = [0, 24], sizes = [16, 8], strides = [1, 1]} : vector<16x32xf32> to vector<16x8xf32>
    %25 = vector.shape_cast %24 : vector<16x8xf32> to vector<2x8x8xf32>
    %26 = vector.shape_cast %19 : vector<2x8x8xf32> to vector<1x2x8x8xf32>
    %27 = vector.shape_cast %21 : vector<2x8x8xf32> to vector<1x2x8x8xf32>
    %28 = vector.shape_cast %23 : vector<2x8x8xf32> to vector<1x2x8x8xf32>
    %29 = vector.shape_cast %25 : vector<2x8x8xf32> to vector<1x2x8x8xf32>
    %30 = tpu.concatenate %26, %27, %28, %29 in 0 : vector<1x2x8x8xf32>, vector<1x2x8x8xf32>, vector<1x2x8x8xf32>, vector<1x2x8x8xf32> -> vector<4x2x8x8xf32>
    %31 = vector.shape_cast %30 : vector<4x2x8x8xf32> to vector<8x8x8xf32>
    %32 = arith.truncf %31 : vector<8x8x8xf32> to vector<8x8x8xbf16>
    %33 = vector.extract_strided_slice %16 {offsets = [0, 32], sizes = [16, 32], strides = [1, 1]} : vector<16x96xf32> to vector<16x32xf32>
    %34 = vector.extract_strided_slice %33 {offsets = [0, 0], sizes = [16, 8], strides = [1, 1]} : vector<16x32xf32> to vector<16x8xf32>
    %35 = vector.shape_cast %34 : vector<16x8xf32> to vector<2x8x8xf32>
    %36 = vector.extract_strided_slice %33 {offsets = [0, 8], sizes = [16, 8], strides = [1, 1]} : vector<16x32xf32> to vector<16x8xf32>
    %37 = vector.shape_cast %36 : vector<16x8xf32> to vector<2x8x8xf32>
    %38 = vector.extract_strided_slice %33 {offsets = [0, 16], sizes = [16, 8], strides = [1, 1]} : vector<16x32xf32> to vector<16x8xf32>
    %39 = vector.shape_cast %38 : vector<16x8xf32> to vector<2x8x8xf32>
    %40 = vector.extract_strided_slice %33 {offsets = [0, 24], sizes = [16, 8], strides = [1, 1]} : vector<16x32xf32> to vector<16x8xf32>
    %41 = vector.shape_cast %40 : vector<16x8xf32> to vector<2x8x8xf32>
    %42 = vector.shape_cast %35 : vector<2x8x8xf32> to vector<1x2x8x8xf32>
    %43 = vector.shape_cast %37 : vector<2x8x8xf32> to vector<1x2x8x8xf32>
    %44 = vector.shape_cast %39 : vector<2x8x8xf32> to vector<1x2x8x8xf32>
    %45 = vector.shape_cast %41 : vector<2x8x8xf32> to vector<1x2x8x8xf32>
    %46 = tpu.concatenate %42, %43, %44, %45 in 0 : vector<1x2x8x8xf32>, vector<1x2x8x8xf32>, vector<1x2x8x8xf32>, vector<1x2x8x8xf32> -> vector<4x2x8x8xf32>
    %47 = vector.shape_cast %46 : vector<4x2x8x8xf32> to vector<8x8x8xf32>
    %48 = arith.truncf %47 : vector<8x8x8xf32> to vector<8x8x8xbf16>
    %49 = vector.extract_strided_slice %16 {offsets = [0, 64], sizes = [16, 32], strides = [1, 1]} : vector<16x96xf32> to vector<16x32xf32>
    %50 = vector.extract_strided_slice %49 {offsets = [0, 0], sizes = [16, 8], strides = [1, 1]} : vector<16x32xf32> to vector<16x8xf32>
    %51 = vector.shape_cast %50 : vector<16x8xf32> to vector<2x8x8xf32>
    %52 = vector.extract_strided_slice %49 {offsets = [0, 8], sizes = [16, 8], strides = [1, 1]} : vector<16x32xf32> to vector<16x8xf32>
    %53 = vector.shape_cast %52 : vector<16x8xf32> to vector<2x8x8xf32>
    %54 = vector.extract_strided_slice %49 {offsets = [0, 16], sizes = [16, 8], strides = [1, 1]} : vector<16x32xf32> to vector<16x8xf32>
    %55 = vector.shape_cast %54 : vector<16x8xf32> to vector<2x8x8xf32>
    %56 = vector.extract_strided_slice %49 {offsets = [0, 24], sizes = [16, 8], strides = [1, 1]} : vector<16x32xf32> to vector<16x8xf32>
    %57 = vector.shape_cast %56 : vector<16x8xf32> to vector<2x8x8xf32>
    %58 = vector.shape_cast %51 : vector<2x8x8xf32> to vector<1x2x8x8xf32>
    %59 = vector.shape_cast %53 : vector<2x8x8xf32> to vector<1x2x8x8xf32>
    %60 = vector.shape_cast %55 : vector<2x8x8xf32> to vector<1x2x8x8xf32>
    %61 = vector.shape_cast %57 : vector<2x8x8xf32> to vector<1x2x8x8xf32>
    %62 = tpu.concatenate %58, %59, %60, %61 in 0 : vector<1x2x8x8xf32>, vector<1x2x8x8xf32>, vector<1x2x8x8xf32>, vector<1x2x8x8xf32> -> vector<4x2x8x8xf32>
    %63 = vector.shape_cast %62 : vector<4x2x8x8xf32> to vector<8x8x8xf32>
    %64 = arith.truncf %63 : vector<8x8x8xf32> to vector<8x8x8xbf16>
    "tpu.trace_start"() <{level = 10 : i32, message = "gsd,gtd->gst"}> : () -> ()
    %cst_6 = arith.constant dense<0.000000e+00> : vector<8x8x8xf32>
    %65 = tpu.matmul %32, %48, %cst_6 {dimension_numbers = #tpu.dot_dimension_numbers<[2], [2], [1], [1], [0, 0, 0, 1, 1, 1], [0], [0]>} : vector<8x8x8xbf16>, vector<8x8x8xbf16>, vector<8x8x8xf32> -> vector<8x8x8xf32>
    "tpu.trace_stop"() : () -> ()
    %c0_7 = arith.constant 0 : index
    %c0_8 = arith.constant 0 : index
    %66 = vector.load %arg1[%c0_7, %c0_8] : memref<2x8xf32, #tpu.memory_space<vmem>>, vector<2x8xf32>
    %cst_9 = arith.constant 1.000000e+00 : f32
    %67 = vector.broadcast %cst_9 : f32 to vector<2x8xf32>
    %68 = arith.subf %66, %67 : vector<2x8xf32>
    %cst_10 = arith.constant 1.000000e+09 : f32
    %69 = vector.broadcast %cst_10 : f32 to vector<2x8xf32>
    %70 = arith.mulf %68, %69 : vector<2x8xf32>
    %71 = vector.shape_cast %70 : vector<2x8xf32> to vector<1x2x1x8xf32>
    %72 = vector.shape_cast %71 : vector<1x2x1x8xf32> to vector<1x2x1x8xf32>
    %73 = vector.broadcast %72 : vector<1x2x1x8xf32> to vector<4x2x1x8xf32>
    %74 = vector.shape_cast %73 : vector<4x2x1x8xf32> to vector<8x1x8xf32>
    %75 = vector.broadcast %74 : vector<8x1x8xf32> to vector<8x8x8xf32>
    %76 = arith.addf %65, %75 : vector<8x8x8xf32>
    %cst_11 = arith.constant dense<0xFF800000> : vector<8x8xf32>
    %77 = vector.multi_reduction <maximumf>, %76, %cst_11 [2] : vector<8x8x8xf32> to vector<8x8xf32>
    %78 = vector.shape_cast %77 : vector<8x8xf32> to vector<8x8x1xf32>
    %79 = vector.broadcast %78 : vector<8x8x1xf32> to vector<8x8x8xf32>
    %80 = arith.subf %76, %79 : vector<8x8x8xf32>
    %81 = math.exp %80 : vector<8x8x8xf32>
    %cst_12 = arith.constant dense<0.000000e+00> : vector<8x8xf32>
    %82 = vector.multi_reduction <add>, %81, %cst_12 [2] : vector<8x8x8xf32> to vector<8x8xf32>
    %83 = vector.shape_cast %82 : vector<8x8xf32> to vector<8x8x1xf32>
    %84 = tpu.reciprocal %83 {approx = true} : vector<8x8x1xf32> -> vector<8x8x1xf32>
    %85 = vector.broadcast %84 : vector<8x8x1xf32> to vector<8x8x8xf32>
    %86 = arith.mulf %81, %85 : vector<8x8x8xf32>
    %87 = arith.truncf %86 : vector<8x8x8xf32> to vector<8x8x8xbf16>
    "tpu.trace_start"() <{level = 10 : i32, message = "gst,gtd->gsd"}> : () -> ()
    %cst_13 = arith.constant dense<0.000000e+00> : vector<8x8x8xf32>
    %88 = tpu.matmul %87, %64, %cst_13 {dimension_numbers = #tpu.dot_dimension_numbers<[2], [1], [1], [2], [0, 0, 0, 1, 1, 2], [0], [0]>} : vector<8x8x8xbf16>, vector<8x8x8xbf16>, vector<8x8x8xf32> -> vector<8x8x8xf32>
    "tpu.trace_stop"() : () -> ()
    %89 = vector.shape_cast %88 : vector<8x8x8xf32> to vector<4x2x8x8xf32>
    %90 = vector.extract_strided_slice %89 {offsets = [0, 0, 0, 0], sizes = [1, 2, 8, 8], strides = [1, 1, 1, 1]} : vector<4x2x8x8xf32> to vector<1x2x8x8xf32>
    %91 = vector.shape_cast %90 : vector<1x2x8x8xf32> to vector<2x8x8xf32>
    %92 = vector.extract_strided_slice %89 {offsets = [1, 0, 0, 0], sizes = [1, 2, 8, 8], strides = [1, 1, 1, 1]} : vector<4x2x8x8xf32> to vector<1x2x8x8xf32>
    %93 = vector.shape_cast %92 : vector<1x2x8x8xf32> to vector<2x8x8xf32>
    %94 = vector.extract_strided_slice %89 {offsets = [2, 0, 0, 0], sizes = [1, 2, 8, 8], strides = [1, 1, 1, 1]} : vector<4x2x8x8xf32> to vector<1x2x8x8xf32>
    %95 = vector.shape_cast %94 : vector<1x2x8x8xf32> to vector<2x8x8xf32>
    %96 = vector.extract_strided_slice %89 {offsets = [3, 0, 0, 0], sizes = [1, 2, 8, 8], strides = [1, 1, 1, 1]} : vector<4x2x8x8xf32> to vector<1x2x8x8xf32>
    %97 = vector.shape_cast %96 : vector<1x2x8x8xf32> to vector<2x8x8xf32>
    %98 = tpu.concatenate %91, %93, %95, %97 in 2 : vector<2x8x8xf32>, vector<2x8x8xf32>, vector<2x8x8xf32>, vector<2x8x8xf32> -> vector<2x8x32xf32>
    %99 = vector.shape_cast %98 : vector<2x8x32xf32> to vector<16x32xf32>
    %100 = arith.truncf %99 : vector<16x32xf32> to vector<16x32xbf16>
    %101 = vector.extract_strided_slice %2 {offsets = [0, 0, 96], sizes = [1, 32, 32], strides = [1, 1, 1]} : vector<2x32x128xbf16> to vector<1x32x32xbf16>
    %102 = vector.shape_cast %101 : vector<1x32x32xbf16> to vector<32x32xbf16>
    %cst_14 = arith.constant dense<0.000000e+00> : vector<16x32xf32>
    %103 = tpu.matmul %100, %102, %cst_14 {dimension_numbers = #tpu.dot_dimension_numbers<[1], [0], [0], [1], [0, 0, 1, 1], [], []>} : vector<16x32xbf16>, vector<32x32xbf16>, vector<16x32xf32> -> vector<16x32xf32>
    %104 = vector.broadcast %5 : vector<1x32xf32> to vector<16x32xf32>
    %105 = arith.addf %103, %104 : vector<16x32xf32>
    %106 = arith.addf %0, %105 : vector<16x32xf32>
    %cst_15 = arith.constant dense<0.000000e+00> : vector<16xf32>
    %107 = vector.multi_reduction <add>, %106, %cst_15 [1] : vector<16x32xf32> to vector<16xf32>
    %108 = vector.shape_cast %107 : vector<16xf32> to vector<16x1xf32>
    %cst_16 = arith.constant 3.200000e+01 : f32
    %109 = vector.broadcast %cst_16 : f32 to vector<16x1xf32>
    %110 = arith.divf %108, %109 : vector<16x1xf32>
    %111 = vector.broadcast %110 : vector<16x1xf32> to vector<16x32xf32>
    %112 = arith.subf %106, %111 : vector<16x32xf32>
    %113 = arith.mulf %112, %112 : vector<16x32xf32>
    %cst_17 = arith.constant dense<0.000000e+00> : vector<16xf32>
    %114 = vector.multi_reduction <add>, %113, %cst_17 [1] : vector<16x32xf32> to vector<16xf32>
    %115 = vector.shape_cast %114 : vector<16xf32> to vector<16x1xf32>
    %cst_18 = arith.constant 3.200000e+01 : f32
    %116 = vector.broadcast %cst_18 : f32 to vector<16x1xf32>
    %117 = arith.divf %115, %116 : vector<16x1xf32>
    %118 = vector.broadcast %110 : vector<16x1xf32> to vector<16x32xf32>
    %119 = arith.subf %106, %118 : vector<16x32xf32>
    %cst_19 = arith.constant 9.99999974E-6 : f32
    %120 = vector.broadcast %cst_19 : f32 to vector<16x1xf32>
    %121 = arith.addf %117, %120 : vector<16x1xf32>
    %122 = math.rsqrt %121 : vector<16x1xf32>
    %123 = vector.broadcast %122 : vector<16x1xf32> to vector<16x32xf32>
    %124 = arith.mulf %119, %123 : vector<16x32xf32>
    %125 = vector.broadcast %6 : vector<1x32xf32> to vector<16x32xf32>
    %126 = arith.mulf %124, %125 : vector<16x32xf32>
    %127 = vector.broadcast %7 : vector<1x32xf32> to vector<16x32xf32>
    %128 = arith.addf %126, %127 : vector<16x32xf32>
    %129 = arith.truncf %128 : vector<16x32xf32> to vector<16x32xbf16>
    %130 = vector.extract_strided_slice %2 {offsets = [1, 0, 0], sizes = [1, 32, 128], strides = [1, 1, 1]} : vector<2x32x128xbf16> to vector<1x32x128xbf16>
    %131 = vector.shape_cast %130 : vector<1x32x128xbf16> to vector<32x128xbf16>
    %cst_20 = arith.constant dense<0.000000e+00> : vector<16x128xf32>
    %132 = tpu.matmul %129, %131, %cst_20 {dimension_numbers = #tpu.dot_dimension_numbers<[1], [0], [0], [1], [0, 0, 1, 1], [], []>} : vector<16x32xbf16>, vector<32x128xbf16>, vector<16x128xf32> -> vector<16x128xf32>
    %133 = vector.broadcast %4 : vector<1x128xf32> to vector<16x128xf32>
    %134 = arith.addf %132, %133 : vector<16x128xf32>
    %cst_21 = arith.constant 5.000000e-01 : f32
    %135 = vector.broadcast %cst_21 : f32 to vector<16x128xf32>
    %136 = arith.mulf %135, %134 : vector<16x128xf32>
    %cst_22 = arith.constant 4.471500e-02 : f32
    %137 = vector.broadcast %cst_22 : f32 to vector<16x128xf32>
    %138 = arith.mulf %137, %134 : vector<16x128xf32>
    %139 = arith.mulf %138, %134 : vector<16x128xf32>
    %140 = arith.mulf %139, %134 : vector<16x128xf32>
    %141 = arith.addf %134, %140 : vector<16x128xf32>
    %cst_23 = arith.constant 0.797884583 : f32
    %142 = vector.broadcast %cst_23 : f32 to vector<16x128xf32>
    %143 = arith.mulf %142, %141 : vector<16x128xf32>
    %144 = math.tanh %143 : vector<16x128xf32>
    %cst_24 = arith.constant 1.000000e+00 : f32
    %145 = vector.broadcast %cst_24 : f32 to vector<16x128xf32>
    %146 = arith.addf %145, %144 : vector<16x128xf32>
    %147 = arith.mulf %136, %146 : vector<16x128xf32>
    %148 = arith.truncf %147 : vector<16x128xf32> to vector<16x128xbf16>
    %c0_25 = arith.constant 0 : index
    %c0_26 = arith.constant 0 : index
    %149 = vector.load %arg3[%c0_25, %c0_26] : memref<128x32xbf16, #tpu.memory_space<vmem>>, vector<128x32xbf16>
    %cst_27 = arith.constant dense<0.000000e+00> : vector<16x32xf32>
    %150 = tpu.matmul %148, %149, %cst_27 {dimension_numbers = #tpu.dot_dimension_numbers<[1], [0], [0], [1], [0, 0, 1, 1], [], []>} : vector<16x128xbf16>, vector<128x32xbf16>, vector<16x32xf32> -> vector<16x32xf32>
    %151 = vector.broadcast %8 : vector<1x32xf32> to vector<16x32xf32>
    %152 = arith.addf %150, %151 : vector<16x32xf32>
    %153 = arith.addf %128, %152 : vector<16x32xf32>
    %cst_28 = arith.constant dense<0.000000e+00> : vector<16xf32>
    %154 = vector.multi_reduction <add>, %153, %cst_28 [1] : vector<16x32xf32> to vector<16xf32>
    %155 = vector.shape_cast %154 : vector<16xf32> to vector<16x1xf32>
    %cst_29 = arith.constant 3.200000e+01 : f32
    %156 = vector.broadcast %cst_29 : f32 to vector<16x1xf32>
    %157 = arith.divf %155, %156 : vector<16x1xf32>
    %158 = vector.broadcast %157 : vector<16x1xf32> to vector<16x32xf32>
    %159 = arith.subf %153, %158 : vector<16x32xf32>
    %160 = arith.mulf %159, %159 : vector<16x32xf32>
    %cst_30 = arith.constant dense<0.000000e+00> : vector<16xf32>
    %161 = vector.multi_reduction <add>, %160, %cst_30 [1] : vector<16x32xf32> to vector<16xf32>
    %162 = vector.shape_cast %161 : vector<16xf32> to vector<16x1xf32>
    %cst_31 = arith.constant 3.200000e+01 : f32
    %163 = vector.broadcast %cst_31 : f32 to vector<16x1xf32>
    %164 = arith.divf %162, %163 : vector<16x1xf32>
    %165 = vector.broadcast %157 : vector<16x1xf32> to vector<16x32xf32>
    %166 = arith.subf %153, %165 : vector<16x32xf32>
    %cst_32 = arith.constant 9.99999974E-6 : f32
    %167 = vector.broadcast %cst_32 : f32 to vector<16x1xf32>
    %168 = arith.addf %164, %167 : vector<16x1xf32>
    %169 = math.rsqrt %168 : vector<16x1xf32>
    %170 = vector.broadcast %169 : vector<16x1xf32> to vector<16x32xf32>
    %171 = arith.mulf %166, %170 : vector<16x32xf32>
    %172 = vector.broadcast %9 : vector<1x32xf32> to vector<16x32xf32>
    %173 = arith.mulf %171, %172 : vector<16x32xf32>
    %174 = vector.broadcast %10 : vector<1x32xf32> to vector<16x32xf32>
    %175 = arith.addf %173, %174 : vector<16x32xf32>
    %c0_33 = arith.constant 0 : index
    %c0_34 = arith.constant 0 : index
    %176 = vector.load %arg5[%c0_33, %c0_34] : memref<16x32xf32, #tpu.memory_space<vmem>>, vector<16x32xf32>
    tpu.vector_store %arg5[%c0_33, %c0_34], %175 {strides = array<i32>} : memref<16x32xf32, #tpu.memory_space<vmem>>, vector<16x32xf32>,
    return
  }
}

</mosaic_0001>

<llo_original>
// kernel: bert_encoder_layer.1
$region0: #{bert_encoder_layer.1}
  #allocation0 [shape = 'u32[]', space=smem, size = 0x4, offset = 0x4, fixed_abs, tag = 'smem constant byte address 0x4 - core index']
  #allocation1 [shape = 'u32[144,128]{1,0:T(1,128)}', space=vmem, size = 0x12000, scoped, tag = 'internal scratch']
  %s0 = inlined_call_operand.vmem [shape: f32[16,32], index: 0, kind: input, shape index: {}]
  %s1 = inlined_call_operand.vmem [shape: f32[2,8], index: 1, kind: input, shape index: {}]
  %s2 = inlined_call_operand.vmem [shape: bf16[2,32,128], index: 2, kind: input, shape index: {}]
  %s3 = inlined_call_operand.vmem [shape: bf16[128,32], index: 3, kind: input, shape index: {}]
  %s4 = inlined_call_operand.vmem [shape: f32[4,128], index: 4, kind: input, shape index: {}]
  %s5 = inlined_call_operand.hbm [shape: f32[16,32], index: 5, kind: output, shape index: {}]
  %s6 = sld [smem:[#allocation0]]
  $region30: #{bert_encoder_layer.1} parent=0
    _
  %s8 = ssub.s32 1, %s6
  %s9 = scalar_select 0, %s8, %s6
  $region1: #{bert_encoder_layer.1} parent=0
    #allocation2 [shape = 'u8[8192]{0}', space=vmem, size = 0x2000, scoped, tag = 'output window, operand 0, single buffered']
    #allocation3 [shape = 's32[1]{0}', space=sflag, size = 0x4, scoped, tag = 'scoped memory for bert_encoder_layer.1']
    %10 = vsyncpa [#allocation3], 0
    // Predicated region
    $region2: #{bert_encoder_layer.1} parent=1 // pred_check
      _
    $region3: #{bert_encoder_layer.1} parent=1 // pred_check_branch
      %12 = sbr.rel (0) target = $region5
    $region4: #{bert_encoder_layer.1} parent=1 // pred_region
      _
    $region5: #{bert_encoder_layer.1} parent=1 // pred_fallthru
      _
    // Predicated region
    $region6: #{bert_encoder_layer.1} parent=1 // pred_check
      _
    $region7: #{bert_encoder_layer.1} parent=1 // pred_check_branch
      %14 = sbr.rel (0) target = $region9
    $region8: #{bert_encoder_layer.1} parent=1 // pred_region
      _
    $region9: #{bert_encoder_layer.1} parent=1 // pred_fallthru
      _
    // Predicated region
    $region10: #{bert_encoder_layer.1} parent=1 // pred_check
      _
    $region11: #{bert_encoder_layer.1} parent=1 // pred_check_branch
      %16 = sbr.rel (0) target = $region13
    $region12: #{bert_encoder_layer.1} parent=1 // pred_region
      _
    $region13: #{bert_encoder_layer.1} parent=1 // pred_fallthru
      _
    // Predicated region
    $region14: #{bert_encoder_layer.1} parent=1 // pred_check
      _
    $region15: #{bert_encoder_layer.1} parent=1 // pred_check_branch
      %18 = sbr.rel (0) target = $region17
    $region16: #{bert_encoder_layer.1} parent=1 // pred_region
      _
    $region17: #{bert_encoder_layer.1} parent=1 // pred_fallthru
      _
    // Predicated region
    $region18: #{bert_encoder_layer.1} parent=1 // pred_check
      _
    $region19: #{bert_encoder_layer.1} parent=1 // pred_check_branch
      %20 = sbr.rel (0) target = $region21
    $region20: #{bert_encoder_layer.1} parent=1 // pred_region
      _
    $region21: #{bert_encoder_layer.1} parent=1 // pred_fallthru
      _
    %v22 = vld [vmem:[%s0] sm:$0xff]
    %v23 = vld [vmem:[%s0 + $0x8] sm:$0xff]
    %v24 = vld [vmem:[%s4] sm:$0xf]
    %v25 = vld [vmem:[%s2] sm:$0xf]
    %v26 = vld [vmem:[%s2 + $0x4] sm:$0xf]
    %v27 = vld [vmem:[%s2 + $0x8] sm:$0xf]
    %v28 = vld [vmem:[%s2 + $0xc] sm:$0xf]
    %v29 = vld [vmem:[%s2 + $0x10] sm:$0xf]
    %v30 = vld [vmem:[%s2 + $0x14] sm:$0xf]
    %v31 = vld [vmem:[%s2 + $0x18] sm:$0xf]
    %v32 = vld [vmem:[%s2 + $0x1c] sm:$0xf]
    %v33 = vpack.c.bf16 %v23, %v22
    %v34 = vlaneseq
    %v35 = vshrl.u32 %v34, 7
    %v36 = vsub.s32 0, %v35
    %v37 = vrot.slane %v24, %v36
    %v42 = vunpack.c.l.b16 %v25
    %v43 = vunpack.c.l.b16 %v26
    %v44 = vunpack.c.l.b16 %v27
    %v45 = vunpack.c.l.b16 %v28
    %v46 = vpack.c.b16 %v43, %v42
    %v47 = vpack.c.b16 %v45, %v44
    %vm50 = vcmask 261120
    %v52 = vsel %vm50, %v33, 0
    %54 = vmatprep.subr.bf16.mxu0 0
    %55 = vmatpush1.bf16.msra.mxu0 0
    %56 = vmatprep.subr.bf16.mxu0 0
    %57 = vmatpush1.bf16.msra.mxu0 0
    %58 = vmatprep.subr.bf16.mxu0 0
    %59 = vmatpush1.bf16.msra.mxu0 0
    %60 = vmatprep.subr.bf16.mxu0 0
    %61 = vmatpush1.bf16.msra.mxu0 0
    %62 = vmatprep.subr.bf16.mxu0 0
    %63 = vmatpush1.bf16.msra.mxu0 0
    %64 = vmatprep.subr.bf16.mxu0 0
    %65 = vmatpush1.bf16.msra.mxu0 0
    %66 = vmatprep.subr.bf16.mxu0 0
    %67 = vmatpush1.bf16.msra.mxu0 %v47
    %68 = vmatprep.subr.bf16.mxu0 0
    %69 = vmatpush1.bf16.msra.mxu0 %v46
    %70 = vmatprep.subr.bf16.mxu0 0
    %71 = vmatpush2.bf16.msra.mxu0 0
    %72 = vmatprep.subr.bf16.mxu0 0
    %73 = vmatpush2.bf16.msra.mxu0 0
    %74 = vmatprep.subr.bf16.mxu0 0
    %75 = vmatpush2.bf16.msra.mxu0 0
    %76 = vmatprep.subr.bf16.mxu0 0
    %77 = vmatpush2.bf16.msra.mxu0 0
    %78 = vmatprep.subr.bf16.mxu0 0
    %79 = vmatpush2.bf16.msra.mxu0 0
    %80 = vmatprep.subr.bf16.mxu0 0
    %81 = vmatpush2.bf16.msra.mxu0 0
    %82 = vmatprep.subr.bf16.mxu0 0
    %83 = vmatpush2.bf16.msra.mxu0 0
    %84 = vmatprep.subr.bf16.mxu0 0
    %85 = vmatpush2.bf16.msra.mxu0 0
    %86 = vmatprep.mubr.bf16.mxu0 0
    %87 = vmatmul.mubr.bf16.gmra.mxu0 %v52
    %v88 = vpop.f32.mrf.mxu0
    %v89 = vadd.f32 %v37, %v88
    %v90 = vpop.f32.mrf.mxu0
    %v91 = vpop.f32.mrf.mxu0
    %v92 = vadd.f32 %v37, %v91
    %v93 = vpop.f32.mrf.mxu0
    %94 = vdwg.mxu0
    %97 = vrot.lane.b32.xlu0 %v89, 120
    %v98 = vpop.permute.xlu0 %97
    %99 = vrot.lane.b32.xlu0 %v92, 120
    %v100 = vpop.permute.xlu0 %99
    %103 = vrot.lane.b32.xlu0 %v89, 112
    %v104 = vpop.permute.xlu0 %103
    %105 = vrot.lane.b32.xlu0 %v92, 112
    %v106 = vpop.permute.xlu0 %105
    %109 = vrot.lane.b32.xlu0 %v89, 104
    %v110 = vpop.permute.xlu0 %109
    %111 = vrot.lane.b32.xlu0 %v92, 104
    %v112 = vpop.permute.xlu0 %111
    %v115 = vpack.c.bf16 %v89, %v89
    %v116 = vpack.c.bf16 %v92, %v92
    %v117 = vpack.c.bf16 %v98, %v98
    %v118 = vpack.c.bf16 %v100, %v100
    %v119 = vpack.c.bf16 %v104, %v104
    %v120 = vpack.c.bf16 %v106, %v106
    %v121 = vpack.c.bf16 %v110, %v110
    %v122 = vpack.c.bf16 %v112, %v112
    %v123 = vld [vmem:[%s1] sm:$0x3]
    %v124 = vsub.f32 %v123, 1.0
    %v125 = vmul.f32 %v124, 1e+09
    %v128 = vunpack.c.l.s4 1966171168
    %v129 = vunpack.c.0.s8 %v128
    %v130 = vlaneseq
    %v131 = vshrl.u32 %v130, 7
    %v132 = vsub.s32 %v129, %v131
    %v133 = vrot.slane %v125, %v132
    %v134 = vcombine.high %v133, %v133
    %v136 = vunpack.c.l.s4 1966171168
    %v137 = vunpack.c.0.s8 %v136
    %v138 = vlaneseq
    %v139 = vshrl.u32 %v138, 7
    %v140 = vsub.s32 %v137, %v139
    %v141 = vrot.slane %v133, %v140
    %v143 = vunpack.c.l.s4 1966171168
    %v144 = vunpack.c.0.s8 %v143
    %v145 = vlaneseq
    %v146 = vshrl.u32 %v145, 7
    %v147 = vsub.s32 %v144, %v146
    %v148 = vrot.slane %v134, %v147
    %v149 = vlaneseq
    %v150 = vshrl.u32 %v149, 7
    %v151 = vsub.s32 0, %v150
    %v152 = vrot.slane %v141, %v151
    %v153 = vlaneseq
    %v154 = vshrl.u32 %v153, 7
    %v155 = vsub.s32 0, %v154
    %v156 = vrot.slane %v148, %v155
    %160 = vrot.lane.b32.xlu0 %v115, 96
    %v161 = vpop.permute.xlu0 %160
    %vm162 = vcmask 64512
    %v164 = vsel %vm162, %v115, 0
    %v167 = vsel %vm162, %v161, 0
    %169 = vmatprep.subr.bf16.mxu0 0
    %170 = vmatpush1.bf16.xpose.msra.mxu0 0
    %171 = vmatprep.subr.bf16.mxu0 0
    %172 = vmatpush1.bf16.xpose.msra.mxu0 0
    %173 = vmatprep.subr.bf16.mxu0 0
    %174 = vmatpush1.bf16.xpose.msra.mxu0 0
    %175 = vmatprep.subr.bf16.mxu0 0
    %176 = vmatpush1.bf16.xpose.msra.mxu0 0
    %177 = vmatprep.subr.bf16.mxu0 0
    %178 = vmatpush1.bf16.xpose.msra.mxu0 0
    %179 = vmatprep.subr.bf16.mxu0 0
    %180 = vmatpush1.bf16.xpose.msra.mxu0 0
    %181 = vmatprep.subr.bf16.mxu0 0
    %182 = vmatpush1.bf16.xpose.msra.mxu0 0
    %183 = vmatprep.subr.bf16.mxu0 0
    %184 = vmatpush1.bf16.xpose.msra.mxu0 %v167
    %185 = vmatprep.subr.bf16.mxu0 0
    %186 = vmatpush2.bf16.xpose.msra.mxu0 0
    %187 = vmatprep.subr.bf16.mxu0 0
    %188 = vmatpush2.bf16.xpose.msra.mxu0 0
    %189 = vmatprep.subr.bf16.mxu0 0
    %190 = vmatpush2.bf16.xpose.msra.mxu0 0
    %191 = vmatprep.subr.bf16.mxu0 0
    %192 = vmatpush2.bf16.xpose.msra.mxu0 0
    %193 = vmatprep.subr.bf16.mxu0 0
    %194 = vmatpush2.bf16.xpose.msra.mxu0 0
    %195 = vmatprep.subr.bf16.mxu0 0
    %196 = vmatpush2.bf16.xpose.msra.mxu0 0
    %197 = vmatprep.subr.bf16.mxu0 0
    %198 = vmatpush2.bf16.xpose.msra.mxu0 0
    %199 = vmatprep.subr.bf16.mxu0 0
    %200 = vmatpush2.bf16.xpose.msra.mxu0 0
    %201 = vmatprep.mubr.bf16.mxu0 0
    %202 = vmatmul.mubr.bf16.gmra.mxu0 %v164
    %v203 = vpop.f32.mrf.mxu0
    %v204 = vadd.f32 %v152, %v203
    %v205 = vpop.f32.mrf.mxu0
    %v206 = vpop.f32.mrf.mxu0
    %v207 = vpop.f32.mrf.mxu0
    %208 = vdwg.mxu0
    %210 = vrot.lane.b32.xlu0 %v116, 96
    %v211 = vpop.permute.xlu0 %210
    %v213 = vsel %vm162, %v116, 0
    %v216 = vsel %vm162, %v211, 0
    %218 = vmatprep.subr.bf16.mxu0 0
    %219 = vmatpush1.bf16.xpose.msra.mxu0 0
    %220 = vmatprep.subr.bf16.mxu0 0
    %221 = vmatpush1.bf16.xpose.msra.mxu0 0
    %222 = vmatprep.subr.bf16.mxu0 0
    %223 = vmatpush1.bf16.xpose.msra.mxu0 0
    %224 = vmatprep.subr.bf16.mxu0 0
    %225 = vmatpush1.bf16.xpose.msra.mxu0 0
    %226 = vmatprep.subr.bf16.mxu0 0
    %227 = vmatpush1.bf16.xpose.msra.mxu0 0
    %228 = vmatprep.subr.bf16.mxu0 0
    %229 = vmatpush1.bf16.xpose.msra.mxu0 0
    %230 = vmatprep.subr.bf16.mxu0 0
    %231 = vmatpush1.bf16.xpose.msra.mxu0 0
    %232 = vmatprep.subr.bf16.mxu0 0
    %233 = vmatpush1.bf16.xpose.msra.mxu0 %v216
    %234 = vmatprep.subr.bf16.mxu0 0
    %235 = vmatpush2.bf16.xpose.msra.mxu0 0
    %236 = vmatprep.subr.bf16.mxu0 0
    %237 = vmatpush2.bf16.xpose.msra.mxu0 0
    %238 = vmatprep.subr.bf16.mxu0 0
    %239 = vmatpush2.bf16.xpose.msra.mxu0 0
    %240 = vmatprep.subr.bf16.mxu0 0
    %241 = vmatpush2.bf16.xpose.msra.mxu0 0
    %242 = vmatprep.subr.bf16.mxu0 0
    %243 = vmatpush2.bf16.xpose.msra.mxu0 0
    %244 = vmatprep.subr.bf16.mxu0 0
    %245 = vmatpush2.bf16.xpose.msra.mxu0 0
    %246 = vmatprep.subr.bf16.mxu0 0
    %247 = vmatpush2.bf16.xpose.msra.mxu0 0
    %248 = vmatprep.subr.bf16.mxu0 0
    %249 = vmatpush2.bf16.xpose.msra.mxu0 0
    %250 = vmatprep.mubr.bf16.mxu0 0
    %251 = vmatmul.mubr.bf16.gmra.mxu0 %v213
    %v252 = vpop.f32.mrf.mxu0
    %v253 = vadd.f32 %v156, %v252
    %v254 = vpop.f32.mrf.mxu0
    %v255 = vpop.f32.mrf.mxu0
    %v256 = vpop.f32.mrf.mxu0
    %257 = vdwg.mxu0
    %259 = vrot.lane.b32.xlu0 %v117, 96
    %v260 = vpop.permute.xlu0 %259
    %v262 = vsel %vm162, %v117, 0
    %v265 = vsel %vm162, %v260, 0
    %267 = vmatprep.subr.bf16.mxu0 0
    %268 = vmatpush1.bf16.xpose.msra.mxu0 0
    %269 = vmatprep.subr.bf16.mxu0 0
    %270 = vmatpush1.bf16.xpose.msra.mxu0 0
    %271 = vmatprep.subr.bf16.mxu0 0
    %272 = vmatpush1.bf16.xpose.msra.mxu0 0
    %273 = vmatprep.subr.bf16.mxu0 0
    %274 = vmatpush1.bf16.xpose.msra.mxu0 0
    %275 = vmatprep.subr.bf16.mxu0 0
    %276 = vmatpush1.bf16.xpose.msra.mxu0 0
    %277 = vmatprep.subr.bf16.mxu0 0
    %278 = vmatpush1.bf16.xpose.msra.mxu0 0
    %279 = vmatprep.subr.bf16.mxu0 0
    %280 = vmatpush1.bf16.xpose.msra.mxu0 0
    %281 = vmatprep.subr.bf16.mxu0 0
    %282 = vmatpush1.bf16.xpose.msra.mxu0 %v265
    %283 = vmatprep.subr.bf16.mxu0 0
    %284 = vmatpush2.bf16.xpose.msra.mxu0 0
    %285 = vmatprep.subr.bf16.mxu0 0
    %286 = vmatpush2.bf16.xpose.msra.mxu0 0
    %287 = vmatprep.subr.bf16.mxu0 0
    %288 = vmatpush2.bf16.xpose.msra.mxu0 0
    %289 = vmatprep.subr.bf16.mxu0 0
    %290 = vmatpush2.bf16.xpose.msra.mxu0 0
    %291 = vmatprep.subr.bf16.mxu0 0
    %292 = vmatpush2.bf16.xpose.msra.mxu0 0
    %293 = vmatprep.subr.bf16.mxu0 0
    %294 = vmatpush2.bf16.xpose.msra.mxu0 0
    %295 = vmatprep.subr.bf16.mxu0 0
    %296 = vmatpush2.bf16.xpose.msra.mxu0 0
    %297 = vmatprep.subr.bf16.mxu0 0
    %298 = vmatpush2.bf16.xpose.msra.mxu0 0
    %299 = vmatprep.mubr.bf16.mxu0 0
    %300 = vmatmul.mubr.bf16.gmra.mxu0 %v262
    %v301 = vpop.f32.mrf.mxu0
    %v302 = vadd.f32 %v152, %v301
    %v303 = vpop.f32.mrf.mxu0
    %v304 = vpop.f32.mrf.mxu0
    %v305 = vpop.f32.mrf.mxu0
    %306 = vdwg.mxu0
    %308 = vrot.lane.b32.xlu0 %v118, 96
    %v309 = vpop.permute.xlu0 %308
    %v311 = vsel %vm162, %v118, 0
    %v314 = vsel %vm162, %v309, 0
    %316 = vmatprep.subr.bf16.mxu0 0
    %317 = vmatpush1.bf16.xpose.msra.mxu0 0
    %318 = vmatprep.subr.bf16.mxu0 0
    %319 = vmatpush1.bf16.xpose.msra.mxu0 0
    %320 = vmatprep.subr.bf16.mxu0 0
    %321 = vmatpush1.bf16.xpose.msra.mxu0 0
    %322 = vmatprep.subr.bf16.mxu0 0
    %323 = vmatpush1.bf16.xpose.msra.mxu0 0
    %324 = vmatprep.subr.bf16.mxu0 0
    %325 = vmatpush1.bf16.xpose.msra.mxu0 0
    %326 = vmatprep.subr.bf16.mxu0 0
    %327 = vmatpush1.bf16.xpose.msra.mxu0 0
    %328 = vmatprep.subr.bf16.mxu0 0
    %329 = vmatpush1.bf16.xpose.msra.mxu0 0
    %330 = vmatprep.subr.bf16.mxu0 0
    %331 = vmatpush1.bf16.xpose.msra.mxu0 %v314
    %332 = vmatprep.subr.bf16.mxu0 0
    %333 = vmatpush2.bf16.xpose.msra.mxu0 0
    %334 = vmatprep.subr.bf16.mxu0 0
    %335 = vmatpush2.bf16.xpose.msra.mxu0 0
    %336 = vmatprep.subr.bf16.mxu0 0
    %337 = vmatpush2.bf16.xpose.msra.mxu0 0
    %338 = vmatprep.subr.bf16.mxu0 0
    %339 = vmatpush2.bf16.xpose.msra.mxu0 0
    %340 = vmatprep.subr.bf16.mxu0 0
    %341 = vmatpush2.bf16.xpose.msra.mxu0 0
    %342 = vmatprep.subr.bf16.mxu0 0
    %343 = vmatpush2.bf16.xpose.msra.mxu0 0
    %344 = vmatprep.subr.bf16.mxu0 0
    %345 = vmatpush2.bf16.xpose.msra.mxu0 0
    %346 = vmatprep.subr.bf16.mxu0 0
    %347 = vmatpush2.bf16.xpose.msra.mxu0 0
    %348 = vmatprep.mubr.bf16.mxu0 0
    %349 = vmatmul.mubr.bf16.gmra.mxu0 %v311
    %v350 = vpop.f32.mrf.mxu0
    %v351 = vadd.f32 %v156, %v350
    %v352 = vpop.f32.mrf.mxu0
    %v353 = vpop.f32.mrf.mxu0
    %v354 = vpop.f32.mrf.mxu0
    %355 = vdwg.mxu0
    %357 = vrot.lane.b32.xlu0 %v119, 96
    %v358 = vpop.permute.xlu0 %357
    %v360 = vsel %vm162, %v119, 0
    %v363 = vsel %vm162, %v358, 0
    %365 = vmatprep.subr.bf16.mxu0 0
    %366 = vmatpush1.bf16.xpose.msra.mxu0 0
    %367 = vmatprep.subr.bf16.mxu0 0
    %368 = vmatpush1.bf16.xpose.msra.mxu0 0
    %369 = vmatprep.subr.bf16.mxu0 0
    %370 = vmatpush1.bf16.xpose.msra.mxu0 0
    %371 = vmatprep.subr.bf16.mxu0 0
    %372 = vmatpush1.bf16.xpose.msra.mxu0 0
    %373 = vmatprep.subr.bf16.mxu0 0
    %374 = vmatpush1.bf16.xpose.msra.mxu0 0
    %375 = vmatprep.subr.bf16.mxu0 0
    %376 = vmatpush1.bf16.xpose.msra.mxu0 0
    %377 = vmatprep.subr.bf16.mxu0 0
    %378 = vmatpush1.bf16.xpose.msra.mxu0 0
    %379 = vmatprep.subr.bf16.mxu0 0
    %380 = vmatpush1.bf16.xpose.msra.mxu0 %v363
    %381 = vmatprep.subr.bf16.mxu0 0
    %382 = vmatpush2.bf16.xpose.msra.mxu0 0
    %383 = vmatprep.subr.bf16.mxu0 0
    %384 = vmatpush2.bf16.xpose.msra.mxu0 0
    %385 = vmatprep.subr.bf16.mxu0 0
    %386 = vmatpush2.bf16.xpose.msra.mxu0 0
    %387 = vmatprep.subr.bf16.mxu0 0
    %388 = vmatpush2.bf16.xpose.msra.mxu0 0
    %389 = vmatprep.subr.bf16.mxu0 0
    %390 = vmatpush2.bf16.xpose.msra.mxu0 0
    %391 = vmatprep.subr.bf16.mxu0 0
    %392 = vmatpush2.bf16.xpose.msra.mxu0 0
    %393 = vmatprep.subr.bf16.mxu0 0
    %394 = vmatpush2.bf16.xpose.msra.mxu0 0
    %395 = vmatprep.subr.bf16.mxu0 0
    %396 = vmatpush2.bf16.xpose.msra.mxu0 0
    %397 = vmatprep.mubr.bf16.mxu0 0
    %398 = vmatmul.mubr.bf16.gmra.mxu0 %v360
    %v399 = vpop.f32.mrf.mxu0
    %v400 = vadd.f32 %v152, %v399
    %v401 = vpop.f32.mrf.mxu0
    %v402 = vpop.f32.mrf.mxu0
    %v403 = vpop.f32.mrf.mxu0
    %404 = vdwg.mxu0
    %406 = vrot.lane.b32.xlu0 %v120, 96
    %v407 = vpop.permute.xlu0 %406
    %v409 = vsel %vm162, %v120, 0
    %v412 = vsel %vm162, %v407, 0
    %414 = vmatprep.subr.bf16.mxu0 0
    %415 = vmatpush1.bf16.xpose.msra.mxu0 0
    %416 = vmatprep.subr.bf16.mxu0 0
    %417 = vmatpush1.bf16.xpose.msra.mxu0 0
    %418 = vmatprep.subr.bf16.mxu0 0
    %419 = vmatpush1.bf16.xpose.msra.mxu0 0
    %420 = vmatprep.subr.bf16.mxu0 0
    %421 = vmatpush1.bf16.xpose.msra.mxu0 0
    %422 = vmatprep.subr.bf16.mxu0 0
    %423 = vmatpush1.bf16.xpose.msra.mxu0 0
    %424 = vmatprep.subr.bf16.mxu0 0
    %425 = vmatpush1.bf16.xpose.msra.mxu0 0
    %426 = vmatprep.subr.bf16.mxu0 0
    %427 = vmatpush1.bf16.xpose.msra.mxu0 0
    %428 = vmatprep.subr.bf16.mxu0 0
    %429 = vmatpush1.bf16.xpose.msra.mxu0 %v412
    %430 = vmatprep.subr.bf16.mxu0 0
    %431 = vmatpush2.bf16.xpose.msra.mxu0 0
    %432 = vmatprep.subr.bf16.mxu0 0
    %433 = vmatpush2.bf16.xpose.msra.mxu0 0
    %434 = vmatprep.subr.bf16.mxu0 0
    %435 = vmatpush2.bf16.xpose.msra.mxu0 0
    %436 = vmatprep.subr.bf16.mxu0 0
    %437 = vmatpush2.bf16.xpose.msra.mxu0 0
    %438 = vmatprep.subr.bf16.mxu0 0
    %439 = vmatpush2.bf16.xpose.msra.mxu0 0
    %440 = vmatprep.subr.bf16.mxu0 0
    %441 = vmatpush2.bf16.xpose.msra.mxu0 0
    %442 = vmatprep.subr.bf16.mxu0 0
    %443 = vmatpush2.bf16.xpose.msra.mxu0 0
    %444 = vmatprep.subr.bf16.mxu0 0
    %445 = vmatpush2.bf16.xpose.msra.mxu0 0
    %446 = vmatprep.mubr.bf16.mxu0 0
    %447 = vmatmul.mubr.bf16.gmra.mxu0 %v409
    %v448 = vpop.f32.mrf.mxu0
    %v449 = vadd.f32 %v156, %v448
    %v450 = vpop.f32.mrf.mxu0
    %v451 = vpop.f32.mrf.mxu0
    %v452 = vpop.f32.mrf.mxu0
    %453 = vdwg.mxu0
    %455 = vrot.lane.b32.xlu0 %v121, 96
    %v456 = vpop.permute.xlu0 %455
    %v458 = vsel %vm162, %v121, 0
    %v461 = vsel %vm162, %v456, 0
    %463 = vmatprep.subr.bf16.mxu0 0
    %464 = vmatpush1.bf16.xpose.msra.mxu0 0
    %465 = vmatprep.subr.bf16.mxu0 0
    %466 = vmatpush1.bf16.xpose.msra.mxu0 0
    %467 = vmatprep.subr.bf16.mxu0 0
    %468 = vmatpush1.bf16.xpose.msra.mxu0 0
    %469 = vmatprep.subr.bf16.mxu0 0
    %470 = vmatpush1.bf16.xpose.msra.mxu0 0
    %471 = vmatprep.subr.bf16.mxu0 0
    %472 = vmatpush1.bf16.xpose.msra.mxu0 0
    %473 = vmatprep.subr.bf16.mxu0 0
    %474 = vmatpush1.bf16.xpose.msra.mxu0 0
    %475 = vmatprep.subr.bf16.mxu0 0
    %476 = vmatpush1.bf16.xpose.msra.mxu0 0
    %477 = vmatprep.subr.bf16.mxu0 0
    %478 = vmatpush1.bf16.xpose.msra.mxu0 %v461
    %479 = vmatprep.subr.bf16.mxu0 0
    %480 = vmatpush2.bf16.xpose.msra.mxu0 0
    %481 = vmatprep.subr.bf16.mxu0 0
    %482 = vmatpush2.bf16.xpose.msra.mxu0 0
    %483 = vmatprep.subr.bf16.mxu0 0
    %484 = vmatpush2.bf16.xpose.msra.mxu0 0
    %485 = vmatprep.subr.bf16.mxu0 0
    %486 = vmatpush2.bf16.xpose.msra.mxu0 0
    %487 = vmatprep.subr.bf16.mxu0 0
    %488 = vmatpush2.bf16.xpose.msra.mxu0 0
    %489 = vmatprep.subr.bf16.mxu0 0
    %490 = vmatpush2.bf16.xpose.msra.mxu0 0
    %491 = vmatprep.subr.bf16.mxu0 0
    %492 = vmatpush2.bf16.xpose.msra.mxu0 0
    %493 = vmatprep.subr.bf16.mxu0 0
    %494 = vmatpush2.bf16.xpose.msra.mxu0 0
    %495 = vmatprep.mubr.bf16.mxu0 0
    %496 = vmatmul.mubr.bf16.gmra.mxu0 %v458
    %v497 = vpop.f32.mrf.mxu0
    %v498 = vadd.f32 %v152, %v497
    %v499 = vpop.f32.mrf.mxu0
    %v500 = vpop.f32.mrf.mxu0
    %v501 = vpop.f32.mrf.mxu0
    %502 = vdwg.mxu0
    %504 = vrot.lane.b32.xlu0 %v122, 96
    %v505 = vpop.permute.xlu0 %504
    %v507 = vsel %vm162, %v122, 0
    %v510 = vsel %vm162, %v505, 0
    %512 = vmatprep.subr.bf16.mxu0 0
    %513 = vmatpush1.bf16.xpose.msra.mxu0 0
    %514 = vmatprep.subr.bf16.mxu0 0
    %515 = vmatpush1.bf16.xpose.msra.mxu0 0
    %516 = vmatprep.subr.bf16.mxu0 0
    %517 = vmatpush1.bf16.xpose.msra.mxu0 0
    %518 = vmatprep.subr.bf16.mxu0 0
    %519 = vmatpush1.bf16.xpose.msra.mxu0 0
    %520 = vmatprep.subr.bf16.mxu0 0
    %521 = vmatpush1.bf16.xpose.msra.mxu0 0
    %522 = vmatprep.subr.bf16.mxu0 0
    %523 = vmatpush1.bf16.xpose.msra.mxu0 0
    %524 = vmatprep.subr.bf16.mxu0 0
    %525 = vmatpush1.bf16.xpose.msra.mxu0 0
    %526 = vmatprep.subr.bf16.mxu0 0
    %527 = vmatpush1.bf16.xpose.msra.mxu0 %v510
    %528 = vmatprep.subr.bf16.mxu0 0
    %529 = vmatpush2.bf16.xpose.msra.mxu0 0
    %530 = vmatprep.subr.bf16.mxu0 0
    %531 = vmatpush2.bf16.xpose.msra.mxu0 0
    %532 = vmatprep.subr.bf16.mxu0 0
    %533 = vmatpush2.bf16.xpose.msra.mxu0 0
    %534 = vmatprep.subr.bf16.mxu0 0
    %535 = vmatpush2.bf16.xpose.msra.mxu0 0
    %536 = vmatprep.subr.bf16.mxu0 0
    %537 = vmatpush2.bf16.xpose.msra.mxu0 0
    %538 = vmatprep.subr.bf16.mxu0 0
    %539 = vmatpush2.bf16.xpose.msra.mxu0 0
    %540 = vmatprep.subr.bf16.mxu0 0
    %541 = vmatpush2.bf16.xpose.msra.mxu0 0
    %542 = vmatprep.subr.bf16.mxu0 0
    %543 = vmatpush2.bf16.xpose.msra.mxu0 0
    %544 = vmatprep.mubr.bf16.mxu0 0
    %545 = vmatmul.mubr.bf16.gmra.mxu0 %v507
    %v546 = vpop.f32.mrf.mxu0
    %v547 = vadd.f32 %v156, %v546
    %v548 = vpop.f32.mrf.mxu0
    %v549 = vpop.f32.mrf.mxu0
    %v550 = vpop.f32.mrf.mxu0
    %551 = vdwg.mxu0
    %v552 = vsel %vm162, %v204, -inf
    %553 = vmax.xlane.f32.xlu0 %v552
    %v554 = vpop.xlane.xlu0 %553
    %v555 = vsel %vm162, %v253, -inf
    %556 = vmax.xlane.f32.xlu0 %v555
    %v557 = vpop.xlane.xlu0 %556
    %v558 = vsel %vm162, %v302, -inf
    %559 = vmax.xlane.f32.xlu0 %v558
    %v560 = vpop.xlane.xlu0 %559
    %v561 = vsel %vm162, %v351, -inf
    %562 = vmax.xlane.f32.xlu0 %v561
    %v563 = vpop.xlane.xlu0 %562
    %v564 = vsel %vm162, %v400, -inf
    %565 = vmax.xlane.f32.xlu0 %v564
    %v566 = vpop.xlane.xlu0 %565
    %v567 = vsel %vm162, %v449, -inf
    %568 = vmax.xlane.f32.xlu0 %v567
    %v569 = vpop.xlane.xlu0 %568
    %v570 = vsel %vm162, %v498, -inf
    %571 = vmax.xlane.f32.xlu0 %v570
    %v572 = vpop.xlane.xlu0 %571
    %v573 = vsel %vm162, %v547, -inf
    %574 = vmax.xlane.f32.xlu0 %v573
    %v575 = vpop.xlane.xlu0 %574
    %v576 = vsub.f32 %v204, %v554
    %v577 = vsub.f32 %v253, %v557
    %v578 = vsub.f32 %v302, %v560
    %v579 = vsub.f32 %v351, %v563
    %v580 = vsub.f32 %v400, %v566
    %v581 = vsub.f32 %v449, %v569
    %v582 = vsub.f32 %v498, %v572
    %v583 = vsub.f32 %v547, %v575
    %v584 = vmul.f32 %v576, 1.442695
    %v585 = vpow.pop %v584
    %v586 = vmul.f32 %v577, 1.442695
    %v587 = vpow.pop %v586
    %v588 = vmul.f32 %v578, 1.442695
    %v589 = vpow.pop %v588
    %v590 = vmul.f32 %v579, 1.442695
    %v591 = vpow.pop %v590
    %v592 = vmul.f32 %v580, 1.442695
    %v593 = vpow.pop %v592
    %v594 = vmul.f32 %v581, 1.442695
    %v595 = vpow.pop %v594
    %v596 = vmul.f32 %v582, 1.442695
    %v597 = vpow.pop %v596
    %v598 = vmul.f32 %v583, 1.442695
    %v599 = vpow.pop %v598
    %v600 = vsel %vm162, %v585, 0.0
    %601 = vadd.xlane.f32.xlu0 %v600
    %v602 = vpop.xlane.xlu0 %601
    %v603 = vsel %vm162, %v587, 0.0
    %604 = vadd.xlane.f32.xlu0 %v603
    %v605 = vpop.xlane.xlu0 %604
    %v606 = vsel %vm162, %v589, 0.0
    %607 = vadd.xlane.f32.xlu0 %v606
    %v608 = vpop.xlane.xlu0 %607
    %v609 = vsel %vm162, %v591, 0.0
    %610 = vadd.xlane.f32.xlu0 %v609
    %v611 = vpop.xlane.xlu0 %610
    %v612 = vsel %vm162, %v593, 0.0
    %613 = vadd.xlane.f32.xlu0 %v612
    %v614 = vpop.xlane.xlu0 %613
    %v615 = vsel %vm162, %v595, 0.0
    %616 = vadd.xlane.f32.xlu0 %v615
    %v617 = vpop.xlane.xlu0 %616
    %v618 = vsel %vm162, %v597, 0.0
    %619 = vadd.xlane.f32.xlu0 %v618
    %v620 = vpop.xlane.xlu0 %619
    %v621 = vsel %vm162, %v599, 0.0
    %622 = vadd.xlane.f32.xlu0 %v621
    %v623 = vpop.xlane.xlu0 %622
    %v624 = vrcp.pop %v602
    %v625 = vrcp.pop %v605
    %v626 = vrcp.pop %v608
    %v627 = vrcp.pop %v611
    %v628 = vrcp.pop %v614
    %v629 = vrcp.pop %v617
    %v630 = vrcp.pop %v620
    %v631 = vrcp.pop %v623
    %v632 = vmul.f32 %v585, %v624
    %v633 = vmul.f32 %v587, %v625
    %v634 = vmul.f32 %v589, %v626
    %v635 = vmul.f32 %v591, %v627
    %v636 = vmul.f32 %v593, %v628
    %v637 = vmul.f32 %v595, %v629
    %v638 = vmul.f32 %v597, %v630
    %v639 = vmul.f32 %v599, %v631
    %v640 = vpack.c.bf16 %v632, %v632
    %v641 = vpack.c.bf16 %v633, %v633
    %v642 = vpack.c.bf16 %v634, %v634
    %v643 = vpack.c.bf16 %v635, %v635
    %v644 = vpack.c.bf16 %v636, %v636
    %v645 = vpack.c.bf16 %v637, %v637
    %v646 = vpack.c.bf16 %v638, %v638
    %v647 = vpack.c.bf16 %v639, %v639
    %648 = vrot.lane.b32.xlu0 %v115, 64
    %v649 = vpop.permute.xlu0 %648
    %v651 = vsel %vm162, %v640, 0
    %vm653 = vcmask 1043456
    %v655 = vsel %vm653, %v649, 0
    %657 = vmatprep.subr.bf16.mxu0 0
    %658 = vmatpush1.bf16.msra.mxu0 0
    %659 = vmatprep.subr.bf16.mxu0 0
    %660 = vmatpush1.bf16.msra.mxu0 0
    %661 = vmatprep.subr.bf16.mxu0 0
    %662 = vmatpush1.bf16.msra.mxu0 0
    %663 = vmatprep.subr.bf16.mxu0 0
    %664 = vmatpush1.bf16.msra.mxu0 0
    %665 = vmatprep.subr.bf16.mxu0 0
    %666 = vmatpush1.bf16.msra.mxu0 0
    %667 = vmatprep.subr.bf16.mxu0 0
    %668 = vmatpush1.bf16.msra.mxu0 0
    %669 = vmatprep.subr.bf16.mxu0 0
    %670 = vmatpush1.bf16.msra.mxu0 0
    %671 = vmatprep.subr.bf16.mxu0 0
    %672 = vmatpush1.bf16.msra.mxu0 %v655
    %673 = vmatprep.subr.bf16.mxu0 0
    %674 = vmatpush2.bf16.msra.mxu0 0
    %675 = vmatprep.subr.bf16.mxu0 0
    %676 = vmatpush2.bf16.msra.mxu0 0
    %677 = vmatprep.subr.bf16.mxu0 0
    %678 = vmatpush2.bf16.msra.mxu0 0
    %679 = vmatprep.subr.bf16.mxu0 0
    %680 = vmatpush2.bf16.msra.mxu0 0
    %681 = vmatprep.subr.bf16.mxu0 0
    %682 = vmatpush2.bf16.msra.mxu0 0
    %683 = vmatprep.subr.bf16.mxu0 0
    %684 = vmatpush2.bf16.msra.mxu0 0
    %685 = vmatprep.subr.bf16.mxu0 0
    %686 = vmatpush2.bf16.msra.mxu0 0
    %687 = vmatprep.subr.bf16.mxu0 0
    %688 = vmatpush2.bf16.msra.mxu0 0
    %689 = vmatprep.mubr.bf16.mxu0 0
    %690 = vmatmul.mubr.bf16.gmra.mxu0 %v651
    %v691 = vpop.f32.mrf.mxu0
    %v692 = vadd.f32 0.0, %v691
    %v693 = vpop.f32.mrf.mxu0
    %v694 = vpop.f32.mrf.mxu0
    %v695 = vpop.f32.mrf.mxu0
    %696 = vdwg.mxu0
    %697 = vrot.lane.b32.xlu0 %v116, 64
    %v698 = vpop.permute.xlu0 %697
    %v700 = vsel %vm162, %v641, 0
    %v703 = vsel %vm653, %v698, 0
    %705 = vmatprep.subr.bf16.mxu0 0
    %706 = vmatpush1.bf16.msra.mxu0 0
    %707 = vmatprep.subr.bf16.mxu0 0
    %708 = vmatpush1.bf16.msra.mxu0 0
    %709 = vmatprep.subr.bf16.mxu0 0
    %710 = vmatpush1.bf16.msra.mxu0 0
    %711 = vmatprep.subr.bf16.mxu0 0
    %712 = vmatpush1.bf16.msra.mxu0 0
    %713 = vmatprep.subr.bf16.mxu0 0
    %714 = vmatpush1.bf16.msra.mxu0 0
    %715 = vmatprep.subr.bf16.mxu0 0
    %716 = vmatpush1.bf16.msra.mxu0 0
    %717 = vmatprep.subr.bf16.mxu0 0
    %718 = vmatpush1.bf16.msra.mxu0 0
    %719 = vmatprep.subr.bf16.mxu0 0
    %720 = vmatpush1.bf16.msra.mxu0 %v703
    %721 = vmatprep.subr.bf16.mxu0 0
    %722 = vmatpush2.bf16.msra.mxu0 0
    %723 = vmatprep.subr.bf16.mxu0 0
    %724 = vmatpush2.bf16.msra.mxu0 0
    %725 = vmatprep.subr.bf16.mxu0 0
    %726 = vmatpush2.bf16.msra.mxu0 0
    %727 = vmatprep.subr.bf16.mxu0 0
    %728 = vmatpush2.bf16.msra.mxu0 0
    %729 = vmatprep.subr.bf16.mxu0 0
    %730 = vmatpush2.bf16.msra.mxu0 0
    %731 = vmatprep.subr.bf16.mxu0 0
    %732 = vmatpush2.bf16.msra.mxu0 0
    %733 = vmatprep.subr.bf16.mxu0 0
    %734 = vmatpush2.bf16.msra.mxu0 0
    %735 = vmatprep.subr.bf16.mxu0 0
    %736 = vmatpush2.bf16.msra.mxu0 0
    %737 = vmatprep.mubr.bf16.mxu0 0
    %738 = vmatmul.mubr.bf16.gmra.mxu0 %v700
    %v739 = vpop.f32.mrf.mxu0
    %v740 = vadd.f32 0.0, %v739
    %v741 = vpop.f32.mrf.mxu0
    %v742 = vpop.f32.mrf.mxu0
    %v743 = vpop.f32.mrf.mxu0
    %744 = vdwg.mxu0
    %745 = vrot.lane.b32.xlu0 %v117, 64
    %v746 = vpop.permute.xlu0 %745
    %v748 = vsel %vm162, %v642, 0
    %v751 = vsel %vm653, %v746, 0
    %753 = vmatprep.subr.bf16.mxu0 0
    %754 = vmatpush1.bf16.msra.mxu0 0
    %755 = vmatprep.subr.bf16.mxu0 0
    %756 = vmatpush1.bf16.msra.mxu0 0
    %757 = vmatprep.subr.bf16.mxu0 0
    %758 = vmatpush1.bf16.msra.mxu0 0
    %759 = vmatprep.subr.bf16.mxu0 0
    %760 = vmatpush1.bf16.msra.mxu0 0
    %761 = vmatprep.subr.bf16.mxu0 0
    %762 = vmatpush1.bf16.msra.mxu0 0
    %763 = vmatprep.subr.bf16.mxu0 0
    %764 = vmatpush1.bf16.msra.mxu0 0
    %765 = vmatprep.subr.bf16.mxu0 0
    %766 = vmatpush1.bf16.msra.mxu0 0
    %767 = vmatprep.subr.bf16.mxu0 0
    %768 = vmatpush1.bf16.msra.mxu0 %v751
    %769 = vmatprep.subr.bf16.mxu0 0
    %770 = vmatpush2.bf16.msra.mxu0 0
    %771 = vmatprep.subr.bf16.mxu0 0
    %772 = vmatpush2.bf16.msra.mxu0 0
    %773 = vmatprep.subr.bf16.mxu0 0
    %774 = vmatpush2.bf16.msra.mxu0 0
    %775 = vmatprep.subr.bf16.mxu0 0
    %776 = vmatpush2.bf16.msra.mxu0 0
    %777 = vmatprep.subr.bf16.mxu0 0
    %778 = vmatpush2.bf16.msra.mxu0 0
    %779 = vmatprep.subr.bf16.mxu0 0
    %780 = vmatpush2.bf16.msra.mxu0 0
    %781 = vmatprep.subr.bf16.mxu0 0
    %782 = vmatpush2.bf16.msra.mxu0 0
    %783 = vmatprep.subr.bf16.mxu0 0
    %784 = vmatpush2.bf16.msra.mxu0 0
    %785 = vmatprep.mubr.bf16.mxu0 0
    %786 = vmatmul.mubr.bf16.gmra.mxu0 %v748
    %v787 = vpop.f32.mrf.mxu0
    %v788 = vadd.f32 0.0, %v787
    %v789 = vpop.f32.mrf.mxu0
    %v790 = vpop.f32.mrf.mxu0
    %v791 = vpop.f32.mrf.mxu0
    %792 = vdwg.mxu0
    %793 = vrot.lane.b32.xlu0 %v118, 64
    %v794 = vpop.permute.xlu0 %793
    %v796 = vsel %vm162, %v643, 0
    %v799 = vsel %vm653, %v794, 0
    %801 = vmatprep.subr.bf16.mxu0 0
    %802 = vmatpush1.bf16.msra.mxu0 0
    %803 = vmatprep.subr.bf16.mxu0 0
    %804 = vmatpush1.bf16.msra.mxu0 0
    %805 = vmatprep.subr.bf16.mxu0 0
    %806 = vmatpush1.bf16.msra.mxu0 0
    %807 = vmatprep.subr.bf16.mxu0 0
    %808 = vmatpush1.bf16.msra.mxu0 0
    %809 = vmatprep.subr.bf16.mxu0 0
    %810 = vmatpush1.bf16.msra.mxu0 0
    %811 = vmatprep.subr.bf16.mxu0 0
    %812 = vmatpush1.bf16.msra.mxu0 0
    %813 = vmatprep.subr.bf16.mxu0 0
    %814 = vmatpush1.bf16.msra.mxu0 0
    %815 = vmatprep.subr.bf16.mxu0 0
    %816 = vmatpush1.bf16.msra.mxu0 %v799
    %817 = vmatprep.subr.bf16.mxu0 0
    %818 = vmatpush2.bf16.msra.mxu0 0
    %819 = vmatprep.subr.bf16.mxu0 0
    %820 = vmatpush2.bf16.msra.mxu0 0
    %821 = vmatprep.subr.bf16.mxu0 0
    %822 = vmatpush2.bf16.msra.mxu0 0
    %823 = vmatprep.subr.bf16.mxu0 0
    %824 = vmatpush2.bf16.msra.mxu0 0
    %825 = vmatprep.subr.bf16.mxu0 0
    %826 = vmatpush2.bf16.msra.mxu0 0
    %827 = vmatprep.subr.bf16.mxu0 0
    %828 = vmatpush2.bf16.msra.mxu0 0
    %829 = vmatprep.subr.bf16.mxu0 0
    %830 = vmatpush2.bf16.msra.mxu0 0
    %831 = vmatprep.subr.bf16.mxu0 0
    %832 = vmatpush2.bf16.msra.mxu0 0
    %833 = vmatprep.mubr.bf16.mxu0 0
    %834 = vmatmul.mubr.bf16.gmra.mxu0 %v796
    %v835 = vpop.f32.mrf.mxu0
    %v836 = vadd.f32 0.0, %v835
    %v837 = vpop.f32.mrf.mxu0
    %v838 = vpop.f32.mrf.mxu0
    %v839 = vpop.f32.mrf.mxu0
    %840 = vdwg.mxu0
    %841 = vrot.lane.b32.xlu0 %v119, 64
    %v842 = vpop.permute.xlu0 %841
    %v844 = vsel %vm162, %v644, 0
    %v847 = vsel %vm653, %v842, 0
    %849 = vmatprep.subr.bf16.mxu0 0
    %850 = vmatpush1.bf16.msra.mxu0 0
    %851 = vmatprep.subr.bf16.mxu0 0
    %852 = vmatpush1.bf16.msra.mxu0 0
    %853 = vmatprep.subr.bf16.mxu0 0
    %854 = vmatpush1.bf16.msra.mxu0 0
    %855 = vmatprep.subr.bf16.mxu0 0
    %856 = vmatpush1.bf16.msra.mxu0 0
    %857 = vmatprep.subr.bf16.mxu0 0
    %858 = vmatpush1.bf16.msra.mxu0 0
    %859 = vmatprep.subr.bf16.mxu0 0
    %860 = vmatpush1.bf16.msra.mxu0 0
    %861 = vmatprep.subr.bf16.mxu0 0
    %862 = vmatpush1.bf16.msra.mxu0 0
    %863 = vmatprep.subr.bf16.mxu0 0
    %864 = vmatpush1.bf16.msra.mxu0 %v847
    %865 = vmatprep.subr.bf16.mxu0 0
    %866 = vmatpush2.bf16.msra.mxu0 0
    %867 = vmatprep.subr.bf16.mxu0 0
    %868 = vmatpush2.bf16.msra.mxu0 0
    %869 = vmatprep.subr.bf16.mxu0 0
    %870 = vmatpush2.bf16.msra.mxu0 0
    %871 = vmatprep.subr.bf16.mxu0 0
    %872 = vmatpush2.bf16.msra.mxu0 0
    %873 = vmatprep.subr.bf16.mxu0 0
    %874 = vmatpush2.bf16.msra.mxu0 0
    %875 = vmatprep.subr.bf16.mxu0 0
    %876 = vmatpush2.bf16.msra.mxu0 0
    %877 = vmatprep.subr.bf16.mxu0 0
    %878 = vmatpush2.bf16.msra.mxu0 0
    %879 = vmatprep.subr.bf16.mxu0 0
    %880 = vmatpush2.bf16.msra.mxu0 0
    %881 = vmatprep.mubr.bf16.mxu0 0
    %882 = vmatmul.mubr.bf16.gmra.mxu0 %v844
    %v883 = vpop.f32.mrf.mxu0
    %v884 = vadd.f32 0.0, %v883
    %v885 = vpop.f32.mrf.mxu0
    %v886 = vpop.f32.mrf.mxu0
    %v887 = vpop.f32.mrf.mxu0
    %888 = vdwg.mxu0
    %889 = vrot.lane.b32.xlu0 %v120, 64
    %v890 = vpop.permute.xlu0 %889
    %v892 = vsel %vm162, %v645, 0
    %v895 = vsel %vm653, %v890, 0
    %897 = vmatprep.subr.bf16.mxu0 0
    %898 = vmatpush1.bf16.msra.mxu0 0
    %899 = vmatprep.subr.bf16.mxu0 0
    %900 = vmatpush1.bf16.msra.mxu0 0
    %901 = vmatprep.subr.bf16.mxu0 0
    %902 = vmatpush1.bf16.msra.mxu0 0
    %903 = vmatprep.subr.bf16.mxu0 0
    %904 = vmatpush1.bf16.msra.mxu0 0
    %905 = vmatprep.subr.bf16.mxu0 0
    %906 = vmatpush1.bf16.msra.mxu0 0
    %907 = vmatprep.subr.bf16.mxu0 0
    %908 = vmatpush1.bf16.msra.mxu0 0
    %909 = vmatprep.subr.bf16.mxu0 0
    %910 = vmatpush1.bf16.msra.mxu0 0
    %911 = vmatprep.subr.bf16.mxu0 0
    %912 = vmatpush1.bf16.msra.mxu0 %v895
    %913 = vmatprep.subr.bf16.mxu0 0
    %914 = vmatpush2.bf16.msra.mxu0 0
    %915 = vmatprep.subr.bf16.mxu0 0
    %916 = vmatpush2.bf16.msra.mxu0 0
    %917 = vmatprep.subr.bf16.mxu0 0
    %918 = vmatpush2.bf16.msra.mxu0 0
    %919 = vmatprep.subr.bf16.mxu0 0
    %920 = vmatpush2.bf16.msra.mxu0 0
    %921 = vmatprep.subr.bf16.mxu0 0
    %922 = vmatpush2.bf16.msra.mxu0 0
    %923 = vmatprep.subr.bf16.mxu0 0
    %924 = vmatpush2.bf16.msra.mxu0 0
    %925 = vmatprep.subr.bf16.mxu0 0
    %926 = vmatpush2.bf16.msra.mxu0 0
    %927 = vmatprep.subr.bf16.mxu0 0
    %928 = vmatpush2.bf16.msra.mxu0 0
    %929 = vmatprep.mubr.bf16.mxu0 0
    %930 = vmatmul.mubr.bf16.gmra.mxu0 %v892
    %v931 = vpop.f32.mrf.mxu0
    %v932 = vadd.f32 0.0, %v931
    %v933 = vpop.f32.mrf.mxu0
    %v934 = vpop.f32.mrf.mxu0
    %v935 = vpop.f32.mrf.mxu0
    %936 = vdwg.mxu0
    %937 = vrot.lane.b32.xlu0 %v121, 64
    %v938 = vpop.permute.xlu0 %937
    %v940 = vsel %vm162, %v646, 0
    %v943 = vsel %vm653, %v938, 0
    %945 = vmatprep.subr.bf16.mxu0 0
    %946 = vmatpush1.bf16.msra.mxu0 0
    %947 = vmatprep.subr.bf16.mxu0 0
    %948 = vmatpush1.bf16.msra.mxu0 0
    %949 = vmatprep.subr.bf16.mxu0 0
    %950 = vmatpush1.bf16.msra.mxu0 0
    %951 = vmatprep.subr.bf16.mxu0 0
    %952 = vmatpush1.bf16.msra.mxu0 0
    %953 = vmatprep.subr.bf16.mxu0 0
    %954 = vmatpush1.bf16.msra.mxu0 0
    %955 = vmatprep.subr.bf16.mxu0 0
    %956 = vmatpush1.bf16.msra.mxu0 0
    %957 = vmatprep.subr.bf16.mxu0 0
    %958 = vmatpush1.bf16.msra.mxu0 0
    %959 = vmatprep.subr.bf16.mxu0 0
    %960 = vmatpush1.bf16.msra.mxu0 %v943
    %961 = vmatprep.subr.bf16.mxu0 0
    %962 = vmatpush2.bf16.msra.mxu0 0
    %963 = vmatprep.subr.bf16.mxu0 0
    %964 = vmatpush2.bf16.msra.mxu0 0
    %965 = vmatprep.subr.bf16.mxu0 0
    %966 = vmatpush2.bf16.msra.mxu0 0
    %967 = vmatprep.subr.bf16.mxu0 0
    %968 = vmatpush2.bf16.msra.mxu0 0
    %969 = vmatprep.subr.bf16.mxu0 0
    %970 = vmatpush2.bf16.msra.mxu0 0
    %971 = vmatprep.subr.bf16.mxu0 0
    %972 = vmatpush2.bf16.msra.mxu0 0
    %973 = vmatprep.subr.bf16.mxu0 0
    %974 = vmatpush2.bf16.msra.mxu0 0
    %975 = vmatprep.subr.bf16.mxu0 0
    %976 = vmatpush2.bf16.msra.mxu0 0
    %977 = vmatprep.mubr.bf16.mxu0 0
    %978 = vmatmul.mubr.bf16.gmra.mxu0 %v940
    %v979 = vpop.f32.mrf.mxu0
    %v980 = vadd.f32 0.0, %v979
    %v981 = vpop.f32.mrf.mxu0
    %v982 = vpop.f32.mrf.mxu0
    %v983 = vpop.f32.mrf.mxu0
    %984 = vdwg.mxu0
    %985 = vrot.lane.b32.xlu0 %v122, 64
    %v986 = vpop.permute.xlu0 %985
    %v988 = vsel %vm162, %v647, 0
    %v991 = vsel %vm653, %v986, 0
    %993 = vmatprep.subr.bf16.mxu0 0
    %994 = vmatpush1.bf16.msra.mxu0 0
    %995 = vmatprep.subr.bf16.mxu0 0
    %996 = vmatpush1.bf16.msra.mxu0 0
    %997 = vmatprep.subr.bf16.mxu0 0
    %998 = vmatpush1.bf16.msra.mxu0 0
    %999 = vmatprep.subr.bf16.mxu0 0
    %1000 = vmatpush1.bf16.msra.mxu0 0
    %1001 = vmatprep.subr.bf16.mxu0 0
    %1002 = vmatpush1.bf16.msra.mxu0 0
    %1003 = vmatprep.subr.bf16.mxu0 0
    %1004 = vmatpush1.bf16.msra.mxu0 0
    %1005 = vmatprep.subr.bf16.mxu0 0
    %1006 = vmatpush1.bf16.msra.mxu0 0
    %1007 = vmatprep.subr.bf16.mxu0 0
    %1008 = vmatpush1.bf16.msra.mxu0 %v991
    %1009 = vmatprep.subr.bf16.mxu0 0
    %1010 = vmatpush2.bf16.msra.mxu0 0
    %1011 = vmatprep.subr.bf16.mxu0 0
    %1012 = vmatpush2.bf16.msra.mxu0 0
    %1013 = vmatprep.subr.bf16.mxu0 0
    %1014 = vmatpush2.bf16.msra.mxu0 0
    %1015 = vmatprep.subr.bf16.mxu0 0
    %1016 = vmatpush2.bf16.msra.mxu0 0
    %1017 = vmatprep.subr.bf16.mxu0 0
    %1018 = vmatpush2.bf16.msra.mxu0 0
    %1019 = vmatprep.subr.bf16.mxu0 0
    %1020 = vmatpush2.bf16.msra.mxu0 0
    %1021 = vmatprep.subr.bf16.mxu0 0
    %1022 = vmatpush2.bf16.msra.mxu0 0
    %1023 = vmatprep.subr.bf16.mxu0 0
    %1024 = vmatpush2.bf16.msra.mxu0 0
    %1025 = vmatprep.mubr.bf16.mxu0 0
    %1026 = vmatmul.mubr.bf16.gmra.mxu0 %v988
    %v1027 = vpop.f32.mrf.mxu0
    %v1028 = vadd.f32 0.0, %v1027
    %v1029 = vpop.f32.mrf.mxu0
    %v1030 = vpop.f32.mrf.mxu0
    %v1031 = vpop.f32.mrf.mxu0
    %1032 = vdwg.mxu0
    %1035 = vrot.lane.b32.xlu0 %v788, 8
    %v1036 = vpop.permute.xlu0 %1035
    %1037 = vrot.lane.b32.xlu0 %v836, 8
    %v1038 = vpop.permute.xlu0 %1037
    %1043 = vrot.lane.b32.xlu0 %v884, 16
    %v1044 = vpop.permute.xlu0 %1043
    %1045 = vrot.lane.b32.xlu0 %v932, 16
    %v1046 = vpop.permute.xlu0 %1045
    %1051 = vrot.lane.b32.xlu0 %v980, 24
    %v1052 = vpop.permute.xlu0 %1051
    %1053 = vrot.lane.b32.xlu0 %v1028, 24
    %v1054 = vpop.permute.xlu0 %1053
    %v1057 = vsel %vm162, %v692, %v1036
    %v1058 = vsel %vm162, %v740, %v1038
    %vm1059 = vcmask 130048
    %v1060 = vsel %vm1059, %v1057, %v1044
    %v1061 = vsel %vm1059, %v1058, %v1046
    %vm1062 = vcmask 195584
    %v1063 = vsel %vm1062, %v1060, %v1052
    %v1064 = vsel %vm1062, %v1061, %v1054
    %v1065 = vpack.c.bf16 %v1064, %v1063
    %v1066 = vlaneseq
    %v1067 = vshrl.u32 %v1066, 7
    %v1068 = vsub.s32 2, %v1067
    %v1069 = vrot.slane %v24, %v1068
    %1070 = vrot.lane.b32.xlu0 %v46, 32
    %v1071 = vpop.permute.xlu0 %1070
    %1072 = vrot.lane.b32.xlu0 %v47, 32
    %v1073 = vpop.permute.xlu0 %1072
    %v1077 = vsel %vm50, %v1065, 0
    %1079 = vmatprep.subr.bf16.mxu0 0
    %1080 = vmatpush1.bf16.msra.mxu0 0
    %1081 = vmatprep.subr.bf16.mxu0 0
    %1082 = vmatpush1.bf16.msra.mxu0 0
    %1083 = vmatprep.subr.bf16.mxu0 0
    %1084 = vmatpush1.bf16.msra.mxu0 0
    %1085 = vmatprep.subr.bf16.mxu0 0
    %1086 = vmatpush1.bf16.msra.mxu0 0
    %1087 = vmatprep.subr.bf16.mxu0 0
    %1088 = vmatpush1.bf16.msra.mxu0 0
    %1089 = vmatprep.subr.bf16.mxu0 0
    %1090 = vmatpush1.bf16.msra.mxu0 0
    %1091 = vmatprep.subr.bf16.mxu0 0
    %1092 = vmatpush1.bf16.msra.mxu0 %v1073
    %1093 = vmatprep.subr.bf16.mxu0 0
    %1094 = vmatpush1.bf16.msra.mxu0 %v1071
    %1095 = vmatprep.subr.bf16.mxu0 0
    %1096 = vmatpush2.bf16.msra.mxu0 0
    %1097 = vmatprep.subr.bf16.mxu0 0
    %1098 = vmatpush2.bf16.msra.mxu0 0
    %1099 = vmatprep.subr.bf16.mxu0 0
    %1100 = vmatpush2.bf16.msra.mxu0 0
    %1101 = vmatprep.subr.bf16.mxu0 0
    %1102 = vmatpush2.bf16.msra.mxu0 0
    %1103 = vmatprep.subr.bf16.mxu0 0
    %1104 = vmatpush2.bf16.msra.mxu0 0
    %1105 = vmatprep.subr.bf16.mxu0 0
    %1106 = vmatpush2.bf16.msra.mxu0 0
    %1107 = vmatprep.subr.bf16.mxu0 0
    %1108 = vmatpush2.bf16.msra.mxu0 0
    %1109 = vmatprep.subr.bf16.mxu0 0
    %1110 = vmatpush2.bf16.msra.mxu0 0
    %1111 = vmatprep.mubr.bf16.mxu0 0
    %1112 = vmatmul.mubr.bf16.gmra.mxu0 %v1077
    %v1113 = vpop.f32.mrf.mxu0
    %v1114 = vadd.f32 %v1069, %v1113
    %v1115 = vpop.f32.mrf.mxu0
    %v1116 = vpop.f32.mrf.mxu0
    %v1117 = vadd.f32 %v1069, %v1116
    %v1118 = vpop.f32.mrf.mxu0
    %1119 = vdwg.mxu0
    %v1120 = vadd.f32 %v22, %v1114
    %v1121 = vadd.f32 %v23, %v1117
    %v1122 = vsel %vm50, %v1120, 0.0
    %1123 = vadd.xlane.f32.xlu0 %v1122
    %v1124 = vpop.xlane.xlu0 %1123
    %v1125 = vsel %vm50, %v1121, 0.0
    %1126 = vadd.xlane.f32.xlu0 %v1125
    %v1127 = vpop.xlane.xlu0 %1126
    %v1128 = vrcp.pop 32.0
    %v1129 = vmul.f32 %v1124, %v1128
    %v1130 = vmul.f32 %v1127, %v1128
    %v1131 = vsub.f32 %v1120, %v1129
    %v1132 = vsub.f32 %v1121, %v1130
    %v1133 = vmul.f32 %v1131, %v1131
    %v1134 = vmul.f32 %v1132, %v1132
    %v1135 = vsel %vm50, %v1133, 0.0
    %1136 = vadd.xlane.f32.xlu0 %v1135
    %v1137 = vpop.xlane.xlu0 %1136
    %v1138 = vsel %vm50, %v1134, 0.0
    %1139 = vadd.xlane.f32.xlu0 %v1138
    %v1140 = vpop.xlane.xlu0 %1139
    %v1141 = vmul.f32 %v1137, %v1128
    %v1142 = vmul.f32 %v1140, %v1128
    %v1143 = vadd.f32 %v1141, 1e-05
    %v1144 = vadd.f32 %v1142, 1e-05
    %v1145 = vrsqrt.pop %v1143
    %v1146 = vrsqrt.pop %v1144
    %v1147 = vmul.f32 %v1131, %v1145
    %v1148 = vmul.f32 %v1132, %v1146
    %1150 = vrot.lane.b32.xlu0 %v1069, 96
    %v1151 = vpop.permute.xlu0 %1150
    %v1153 = vmul.f32 %v1147, %v1151
    %v1154 = vmul.f32 %v1148, %v1151
    %1155 = vrot.lane.b32.xlu0 %v1069, 64
    %v1156 = vpop.permute.xlu0 %1155
    %v1158 = vadd.f32 %v1153, %v1156
    %v1159 = vadd.f32 %v1154, %v1156
    %v1160 = vpack.c.bf16 %v1159, %v1158
    %v1161 = vlaneseq
    %v1162 = vshrl.u32 %v1161, 7
    %v1163 = vsub.s32 1, %v1162
    %v1164 = vrot.slane %v24, %v1163
    %v1169 = vunpack.c.l.b16 %v29
    %v1170 = vunpack.c.l.b16 %v30
    %v1171 = vunpack.c.l.b16 %v31
    %v1172 = vunpack.c.l.b16 %v32
    %v1173 = vpack.c.b16 %v1170, %v1169
    %v1174 = vpack.c.b16 %v1172, %v1171
    %v1178 = vsel %vm50, %v1160, 0
    %1180 = vmatprep.subr.bf16.mxu0 0
    %1181 = vmatpush1.bf16.msra.mxu0 0
    %1182 = vmatprep.subr.bf16.mxu0 0
    %1183 = vmatpush1.bf16.msra.mxu0 0
    %1184 = vmatprep.subr.bf16.mxu0 0
    %1185 = vmatpush1.bf16.msra.mxu0 0
    %1186 = vmatprep.subr.bf16.mxu0 0
    %1187 = vmatpush1.bf16.msra.mxu0 0
    %1188 = vmatprep.subr.bf16.mxu0 0
    %1189 = vmatpush1.bf16.msra.mxu0 0
    %1190 = vmatprep.subr.bf16.mxu0 0
    %1191 = vmatpush1.bf16.msra.mxu0 0
    %1192 = vmatprep.subr.bf16.mxu0 0
    %1193 = vmatpush1.bf16.msra.mxu0 %v1174
    %1194 = vmatprep.subr.bf16.mxu0 0
    %1195 = vmatpush1.bf16.msra.mxu0 %v1173
    %1196 = vmatprep.subr.bf16.mxu0 0
    %1197 = vmatpush2.bf16.msra.mxu0 0
    %1198 = vmatprep.subr.bf16.mxu0 0
    %1199 = vmatpush2.bf16.msra.mxu0 0
    %1200 = vmatprep.subr.bf16.mxu0 0
    %1201 = vmatpush2.bf16.msra.mxu0 0
    %1202 = vmatprep.subr.bf16.mxu0 0
    %1203 = vmatpush2.bf16.msra.mxu0 0
    %1204 = vmatprep.subr.bf16.mxu0 0
    %1205 = vmatpush2.bf16.msra.mxu0 0
    %1206 = vmatprep.subr.bf16.mxu0 0
    %1207 = vmatpush2.bf16.msra.mxu0 0
    %1208 = vmatprep.subr.bf16.mxu0 0
    %1209 = vmatpush2.bf16.msra.mxu0 0
    %1210 = vmatprep.subr.bf16.mxu0 0
    %1211 = vmatpush2.bf16.msra.mxu0 0
    %1212 = vmatprep.mubr.bf16.mxu0 0
    %1213 = vmatmul.mubr.bf16.gmra.mxu0 %v1178
    %v1214 = vpop.f32.mrf.mxu0
    %v1215 = vadd.f32 %v1164, %v1214
    %v1216 = vpop.f32.mrf.mxu0
    %v1217 = vpop.f32.mrf.mxu0
    %v1218 = vadd.f32 %v1164, %v1217
    %v1219 = vpop.f32.mrf.mxu0
    %1220 = vdwg.mxu0
    %v1221 = vmul.f32 %v1215, 0.5
    %v1222 = vmul.f32 %v1218, 0.5
    %v1223 = vmul.f32 %v1215, 0.044715
    %v1224 = vmul.f32 %v1218, 0.044715
    %v1225 = vmul.f32 %v1223, %v1215
    %v1226 = vmul.f32 %v1224, %v1218
    %v1227 = vmul.f32 %v1225, %v1215
    %v1228 = vmul.f32 %v1226, %v1218
    %v1229 = vadd.f32 %v1215, %v1227
    %v1230 = vadd.f32 %v1218, %v1228
    %v1231 = vmul.f32 %v1229, 0.7978846
    %v1232 = vmul.f32 %v1230, 0.7978846
    %v1233 = vtanh.pop %v1231
    %v1234 = vtanh.pop %v1232
    %v1235 = vadd.f32 %v1233, 1.0
    %v1236 = vadd.f32 %v1234, 1.0
    %v1237 = vmul.f32 %v1221, %v1235
    %v1238 = vmul.f32 %v1222, %v1236
    %v1239 = vpack.c.bf16 %v1238, %v1237
    %v1240 = vld [vmem:[%s3] sm:$0xf]
    %v1241 = vld [vmem:[%s3 + $0x4] sm:$0xf]
    %v1242 = vld [vmem:[%s3 + $0x8] sm:$0xf]
    %v1243 = vld [vmem:[%s3 + $0xc] sm:$0xf]
    %v1244 = vld [vmem:[%s3 + $0x10] sm:$0xf]
    %v1245 = vld [vmem:[%s3 + $0x14] sm:$0xf]
    %v1246 = vld [vmem:[%s3 + $0x18] sm:$0xf]
    %v1247 = vld [vmem:[%s3 + $0x1c] sm:$0xf]
    %v1248 = vld [vmem:[%s3 + $0x20] sm:$0xf]
    %v1249 = vld [vmem:[%s3 + $0x24] sm:$0xf]
    %v1250 = vld [vmem:[%s3 + $0x28] sm:$0xf]
    %v1251 = vld [vmem:[%s3 + $0x2c] sm:$0xf]
    %v1252 = vld [vmem:[%s3 + $0x30] sm:$0xf]
    %v1253 = vld [vmem:[%s3 + $0x34] sm:$0xf]
    %v1254 = vld [vmem:[%s3 + $0x38] sm:$0xf]
    %v1255 = vld [vmem:[%s3 + $0x3c] sm:$0xf]
    %v1272 = vunpack.c.l.b16 %v1240
    %v1273 = vunpack.c.l.b16 %v1241
    %v1274 = vunpack.c.l.b16 %v1242
    %v1275 = vunpack.c.l.b16 %v1243
    %v1276 = vunpack.c.l.b16 %v1244
    %v1277 = vunpack.c.l.b16 %v1245
    %v1278 = vunpack.c.l.b16 %v1246
    %v1279 = vunpack.c.l.b16 %v1247
    %v1280 = vunpack.c.l.b16 %v1248
    %v1281 = vunpack.c.l.b16 %v1249
    %v1282 = vunpack.c.l.b16 %v1250
    %v1283 = vunpack.c.l.b16 %v1251
    %v1284 = vunpack.c.l.b16 %v1252
    %v1285 = vunpack.c.l.b16 %v1253
    %v1286 = vunpack.c.l.b16 %v1254
    %v1287 = vunpack.c.l.b16 %v1255
    %v1288 = vpack.c.b16 %v1273, %v1272
    %v1289 = vpack.c.b16 %v1275, %v1274
    %v1290 = vpack.c.b16 %v1277, %v1276
    %v1291 = vpack.c.b16 %v1279, %v1278
    %v1292 = vpack.c.b16 %v1281, %v1280
    %v1293 = vpack.c.b16 %v1283, %v1282
    %v1294 = vpack.c.b16 %v1285, %v1284
    %v1295 = vpack.c.b16 %v1287, %v1286
    %1304 = vrot.lane.b32.xlu0 %v1069, 32
    %v1305 = vpop.permute.xlu0 %1304
    %1307 = vmatprep.subr.bf16.mxu0 0
    %1308 = vmatpush1.bf16.msra.mxu0 %v1295
    %1309 = vmatprep.subr.bf16.mxu0 0
    %1310 = vmatpush1.bf16.msra.mxu0 %v1294
    %1311 = vmatprep.subr.bf16.mxu0 0
    %1312 = vmatpush1.bf16.msra.mxu0 %v1293
    %1313 = vmatprep.subr.bf16.mxu0 0
    %1314 = vmatpush1.bf16.msra.mxu0 %v1292
    %1315 = vmatprep.subr.bf16.mxu0 0
    %1316 = vmatpush1.bf16.msra.mxu0 %v1291
    %1317 = vmatprep.subr.bf16.mxu0 0
    %1318 = vmatpush1.bf16.msra.mxu0 %v1290
    %1319 = vmatprep.subr.bf16.mxu0 0
    %1320 = vmatpush1.bf16.msra.mxu0 %v1289
    %1321 = vmatprep.subr.bf16.mxu0 0
    %1322 = vmatpush1.bf16.msra.mxu0 %v1288
    %1323 = vmatprep.subr.bf16.mxu0 0
    %1324 = vmatpush2.bf16.msra.mxu0 0
    %1325 = vmatprep.subr.bf16.mxu0 0
    %1326 = vmatpush2.bf16.msra.mxu0 0
    %1327 = vmatprep.subr.bf16.mxu0 0
    %1328 = vmatpush2.bf16.msra.mxu0 0
    %1329 = vmatprep.subr.bf16.mxu0 0
    %1330 = vmatpush2.bf16.msra.mxu0 0
    %1331 = vmatprep.subr.bf16.mxu0 0
    %1332 = vmatpush2.bf16.msra.mxu0 0
    %1333 = vmatprep.subr.bf16.mxu0 0
    %1334 = vmatpush2.bf16.msra.mxu0 0
    %1335 = vmatprep.subr.bf16.mxu0 0
    %1336 = vmatpush2.bf16.msra.mxu0 0
    %1337 = vmatprep.subr.bf16.mxu0 0
    %1338 = vmatpush2.bf16.msra.mxu0 0
    %1339 = vmatprep.mubr.bf16.mxu0 0
    %1340 = vmatmul.mubr.bf16.gmra.mxu0 %v1239
    %v1341 = vpop.f32.mrf.mxu0
    %v1342 = vadd.f32 %v1305, %v1341
    %v1343 = vpop.f32.mrf.mxu0
    %v1344 = vpop.f32.mrf.mxu0
    %v1345 = vadd.f32 %v1305, %v1344
    %v1346 = vpop.f32.mrf.mxu0
    %1347 = vdwg.mxu0
    %v1348 = vadd.f32 %v1158, %v1342
    %v1349 = vadd.f32 %v1159, %v1345
    %v1350 = vsel %vm50, %v1348, 0.0
    %1351 = vadd.xlane.f32.xlu0 %v1350
    %v1352 = vpop.xlane.xlu0 %1351
    %v1353 = vsel %vm50, %v1349, 0.0
    %1354 = vadd.xlane.f32.xlu0 %v1353
    %v1355 = vpop.xlane.xlu0 %1354
    %v1356 = vmul.f32 %v1352, %v1128
    %v1357 = vmul.f32 %v1355, %v1128
    %v1358 = vsub.f32 %v1348, %v1356
    %v1359 = vsub.f32 %v1349, %v1357
    %v1360 = vmul.f32 %v1358, %v1358
    %v1361 = vmul.f32 %v1359, %v1359
    %v1362 = vsel %vm50, %v1360, 0.0
    %1363 = vadd.xlane.f32.xlu0 %v1362
    %v1364 = vpop.xlane.xlu0 %1363
    %v1365 = vsel %vm50, %v1361, 0.0
    %1366 = vadd.xlane.f32.xlu0 %v1365
    %v1367 = vpop.xlane.xlu0 %1366
    %v1368 = vmul.f32 %v1364, %v1128
    %v1369 = vmul.f32 %v1367, %v1128
    %v1370 = vadd.f32 %v1368, 1e-05
    %v1371 = vadd.f32 %v1369, 1e-05
    %v1372 = vrsqrt.pop %v1370
    %v1373 = vrsqrt.pop %v1371
    %v1374 = vmul.f32 %v1358, %v1372
    %v1375 = vmul.f32 %v1359, %v1373
    %v1376 = vlaneseq
    %v1377 = vshrl.u32 %v1376, 7
    %v1378 = vsub.s32 3, %v1377
    %v1379 = vrot.slane %v24, %v1378
    %v1380 = vmul.f32 %v1374, %v1379
    %v1381 = vmul.f32 %v1375, %v1379
    %1383 = vrot.lane.b32.xlu0 %v1379, 96
    %v1384 = vpop.permute.xlu0 %1383
    %v1386 = vadd.f32 %v1380, %v1384
    %v1387 = vadd.f32 %v1381, %v1384
    %1388 = vst.msk [vmem:[#allocation2] sm:$0xff] %vm50, %v1386
    %1389 = vst.msk [vmem:[#allocation2 + $0x8] sm:$0xff] %vm50, %v1387
    // Predicated region
    $region22: #{bert_encoder_layer.1} parent=1 // pred_check
      _
    $region23: #{bert_encoder_layer.1} parent=1 // pred_check_branch
      %1391 = sbr.rel (0) target = $region25
    $region24: #{bert_encoder_layer.1} parent=1 // pred_region
      %s1393 = ssub.s32 256, 256
      %1394 = vsyncadd [#allocation3], %s1393
      %s1395 = sshll.u32 [#allocation2], 4
      %s1396 = int_to_ptr.vmem [resolvable:$true] %s1395
      %1401 = dma.vmem_to_hbm [thread:$0]  %s1396, 256, %s5, [#allocation3], 128, 128, 8
    $region25: #{bert_encoder_layer.1} parent=1 // pred_fallthru
      _
    // Predicated region
    $region26: #{bert_encoder_layer.1} parent=1 // pred_check
      _
    $region27: #{bert_encoder_layer.1} parent=1 // pred_check_branch
      %1403 = sbr.rel (0) target = $region29
    $region28: #{bert_encoder_layer.1} parent=1 // pred_region
      %1404 = dma.done [#allocation3], 256
    $region29: #{bert_encoder_layer.1} parent=1 // pred_fallthru
      _
    %1405 = vsyncpa [#allocation3], 1

</llo_original>
